<compile_context>
chip_gen: v5e
topology: v5e:2x2
jax: 0.10.0
libtpu: 0.0.40
codegen_flags: <defaults>
</compile_context>

<pallas_src>
import functools
import math

import jax
import jax.numpy as jnp
from jax.experimental import pallas as pl
from jax.experimental.pallas import tpu as pltpu


# ----------------------------------------------------------------------------
# Helpers
# ----------------------------------------------------------------------------
def _round_up(x, m):
    return ((x + m - 1) // m) * m


def _const_spec(a):
    """Full-array block, same block for every grid step (stays VMEM-resident)."""
    nd = a.ndim
    return pl.BlockSpec(a.shape, lambda *_, _nd=nd: (0,) * _nd)


def _wspecs(pairs):
    specs = []
    for w, b in pairs:
        specs.append(_const_spec(w))
        specs.append(_const_spec(b))
    return specs


def _wargs(pairs):
    args = []
    for w, b in pairs:
        args.extend((w, b))
    return args


def _layer(x, w_ref, b_ref, relu=True):
    """act((x @ w) + b) with f32 accumulation; BN scale is folded into w."""
    w = w_ref[...]
    y = jnp.dot(x.astype(w.dtype), w, preferred_element_type=jnp.float32)
    y = y + b_ref[...]
    if relu:
        y = jnp.maximum(y, 0.0)
    return y


# ----------------------------------------------------------------------------
# Pallas kernels
# ----------------------------------------------------------------------------
def _stage_a_kernel(x_ref,
                    wc1, bc1, wc2, bc2,
                    ws1, bs1, ws2, bs2, ws3, bs3,
                    gmax_ref,
                    *, n_valid, tile_n, need_mask):
    """Per-point conv1/conv2 + STN conv1..3 + running global max over points."""
    b = pl.program_id(0)
    n = pl.program_id(1)

    @pl.when((b == 0) & (n == 0))
    def _init():
        gmax_ref[...] = jnp.full_like(gmax_ref, -jnp.inf)

    x = x_ref[...]                                  # (tile_n, 3) f32
    x1 = _layer(x, wc1, bc1)                        # (tile_n, 64)
    x2 = _layer(x1, wc2, bc2)                       # (tile_n, 64)
    h = _layer(x2, ws1, bs1)                        # (tile_n, 64)
    h = _layer(h, ws2, bs2)                         # (tile_n, 128)
    h = _layer(h, ws3, bs3)                         # (tile_n, 1024)

    if need_mask:
        row = n * tile_n + jax.lax.broadcasted_iota(jnp.int32, (tile_n, 1), 0)
        h = jnp.where(row < n_valid, h, -jnp.inf)

    tile_max = jnp.max(h, axis=0, keepdims=True)    # (1, 1024)
    nb = gmax_ref.shape[0]
    row_ids = jax.lax.broadcasted_iota(jnp.int32, (nb, 1), 0)
    cur = gmax_ref[...]                             # resident (B, 1024) accumulator
    gmax_ref[...] = jnp.where(row_ids == b, jnp.maximum(cur, tile_max), cur)


def _stn_head_kernel(g_ref, wf1, bf1, wf2, bf2, wf3, bf3, o_ref):
    """STN fc1+fc2+fc3 fused; the identity matrix is folded into fc3's bias."""
    h = _layer(g_ref[...], wf1, bf1)                # (B, 512)
    h = _layer(h, wf2, bf2)                         # (B, 256)
    o_ref[...] = _layer(h, wf3, bf3, relu=False)    # (B, 4096)


def _stage_c_kernel(x_ref, t_ref,
                    wc1, bc1, wc2, bc2, wc3, bc3, wc4, bc4, wc5, bc5,
                    o_ref):
    """Recompute conv1/conv2, apply STN transform, conv3/conv4, conv5(concat)."""
    x = x_ref[...]                                  # (tile, 3) f32
    x1 = _layer(x, wc1, bc1)                        # (tile, 64)
    x2 = _layer(x1, wc2, bc2)                       # (tile, 64)

    t = t_ref[...].astype(jnp.bfloat16)             # (64, 64) per-batch transform
    x2t = jnp.dot(x2.astype(jnp.bfloat16), t, preferred_element_type=jnp.float32)

    x3 = _layer(x2t, wc3, bc3)                      # (tile, 128)
    x4 = _layer(x3, wc4, bc4)                       # (tile, 256)

    # conv5 on concat([x1, x2t, x3, x4]) as 4 partial matmuls (no HBM concat).
    dt = wc5.dtype
    acc = jnp.dot(x1.astype(dt), wc5[0:64, :], preferred_element_type=jnp.float32)
    acc = acc + jnp.dot(x2t.astype(dt), wc5[64:128, :], preferred_element_type=jnp.float32)
    acc = acc + jnp.dot(x3.astype(dt), wc5[128:256, :], preferred_element_type=jnp.float32)
    acc = acc + jnp.dot(x4.astype(dt), wc5[256:512, :], preferred_element_type=jnp.float32)
    acc = acc + bc5[...]
    o_ref[...] = jnp.maximum(acc, 0.0).astype(o_ref.dtype)


# ----------------------------------------------------------------------------
# Parameter construction (deterministic, PyTorch-style init, BN folded)
# ----------------------------------------------------------------------------
def _conv_or_linear_init(key, cin, cout, bias):
    k1, k2 = jax.random.split(key)
    bound = 1.0 / math.sqrt(cin)
    w = jax.random.uniform(k1, (cout, cin), jnp.float32, -bound, bound)
    b = (jax.random.uniform(k2, (cout,), jnp.float32, -bound, bound)
         if bias else jnp.zeros((cout,), jnp.float32))
    return w, b


def _fold_bn(w, b, eps=1e-5):
    """Fold eval-mode BN (default stats) + bias into (w_t, bias)."""
    c = w.shape[0]
    gamma = jnp.ones((c,), jnp.float32)
    beta = jnp.zeros((c,), jnp.float32)
    mean = jnp.zeros((c,), jnp.float32)
    var = jnp.ones((c,), jnp.float32)
    s = gamma / jnp.sqrt(var + eps)
    w_t = (w * s[:, None]).T                        # (cin, cout), scale folded in
    bias = beta + s * (b - mean)
    return w_t, bias.reshape(1, -1)


def init_pointnet_params(key, n_emb_dims):
    keys = iter(jax.random.split(key, 16))
    p = {}
    for name, cin, cout in [("conv1", 3, 64), ("conv2", 64, 64),
                            ("conv3", 64, 128), ("conv4", 128, 256),
                            ("conv5", 512, n_emb_dims)]:
        w, b = _conv_or_linear_init(next(keys), cin, cout, bias=False)
        p[name] = _fold_bn(w, b)
    stn = {}
    for name, cin, cout in [("conv1", 64, 64), ("conv2", 64, 128),
                            ("conv3", 128, 1024), ("fc1", 1024, 512),
                            ("fc2", 512, 256)]:
        w, b = _conv_or_linear_init(next(keys), cin, cout, bias=True)
        stn[name] = _fold_bn(w, b)
    # fc3: no BN / no ReLU; fold the identity-matrix addition into the bias.
    w, b = _conv_or_linear_init(next(keys), 256, 64 * 64, bias=True)
    stn["fc3"] = (w.T, (b + jnp.eye(64, dtype=jnp.float32).reshape(-1)).reshape(1, -1))
    p["stn"] = stn
    return p


def cast_params_for_kernel(p):
    """bf16 matmul weights (f32 for the tiny K=3 conv1), f32 biases."""
    out = {}
    for k, v in p.items():
        if isinstance(v, dict):
            out[k] = cast_params_for_kernel(v)
        else:
            w, b = v
            wd = jnp.float32 if (k == "conv1" and w.shape[0] == 3) else jnp.bfloat16
            out[k] = (w.astype(wd), b.astype(jnp.float32))
    return out


# ----------------------------------------------------------------------------
# Forward pass
# ----------------------------------------------------------------------------
def pointnet_forward(x, kparams, *, tile_n=512):
    """x: (B, 3, N) float32 (PyTorch NCW) -> (B, n_emb_dims, N)."""
    p = kparams
    B, _, N = x.shape
    n_emb = p["conv5"][0].shape[1]

    xn = jnp.transpose(x, (0, 2, 1)).astype(jnp.float32)          # (B, N, 3)
    tile = min(tile_n, _round_up(N, 8))
    n_pad = _round_up(N, tile)
    if n_pad != N:
        xn = jnp.pad(xn, ((0, 0), (0, n_pad - N), (0, 0)))
    n_tiles = n_pad // tile

    trunk_a = [p["conv1"], p["conv2"]]
    stn_convs = [p["stn"]["conv1"], p["stn"]["conv2"], p["stn"]["conv3"]]
    stn_fcs = [p["stn"]["fc1"], p["stn"]["fc2"], p["stn"]["fc3"]]
    trunk_c = [p["conv1"], p["conv2"], p["conv3"], p["conv4"], p["conv5"]]

    # --- Stage A: conv1/conv2 + STN convs + tiled global max ----------------
    gmax = pl.pallas_call(
        functools.partial(_stage_a_kernel, n_valid=N, tile_n=tile,
                          need_mask=(n_pad != N)),
        out_shape=jax.ShapeDtypeStruct((B, 1024), jnp.float32),
        grid=(B, n_tiles),
        in_specs=[pl.BlockSpec((None, tile, 3), lambda b, n: (b, n, 0))]
                 + _wspecs(trunk_a + stn_convs),
        out_specs=pl.BlockSpec((B, 1024), lambda b, n: (0, 0)),
        compiler_params=pltpu.CompilerParams(
            dimension_semantics=("arbitrary", "arbitrary")),
    )(xn, *_wargs(trunk_a + stn_convs))

    # --- Stage B: STN head fc1+fc2+fc3 (+ identity) --------------------------
    trans = pl.pallas_call(
        _stn_head_kernel,
        out_shape=jax.ShapeDtypeStruct((B, 64 * 64), jnp.float32),
        grid=(1,),
        in_specs=[_const_spec(gmax)] + _wspecs(stn_fcs),
        out_specs=pl.BlockSpec((B, 64 * 64), lambda i: (0, 0)),
        compiler_params=pltpu.CompilerParams(
            dimension_semantics=("arbitrary",)),
    )(gmax, *_wargs(stn_fcs))
    trans = trans.reshape(B, 64, 64)

    # --- Stage C: transform + conv3/conv4 + conv5 over the implicit concat ---
    out = pl.pallas_call(
        _stage_c_kernel,
        out_shape=jax.ShapeDtypeStruct((B, n_pad, n_emb), jnp.float32),
        grid=(B, n_tiles),
        in_specs=[pl.BlockSpec((None, tile, 3), lambda b, n: (b, n, 0)),
                  pl.BlockSpec((None, 64, 64), lambda b, n: (b, 0, 0))]
                 + _wspecs(trunk_c),
        out_specs=pl.BlockSpec((None, tile, n_emb), lambda b, n: (b, n, 0)),
        compiler_params=pltpu.CompilerParams(
            dimension_semantics=("parallel", "parallel")),
    )(xn, trans, *_wargs(trunk_c))

    out = out[:, :N, :]
    return jnp.transpose(out, (0, 2, 1))                          # (B, n_emb, N)


# ----------------------------------------------------------------------------
# Pure-jnp reference (same folded f32 parameters) for validation
# ----------------------------------------------------------------------------
def reference_forward(x, p):
    B, _, N = x.shape

    def lay(h, wb, relu=True):
        w, b = wb
        y = h @ w + b
        return jnp.maximum(y, 0.0) if relu else y

    xp = jnp.transpose(x, (0, 2, 1))
    x1 = lay(xp, p["conv1"])
    x2 = lay(x1, p["conv2"])
    h = lay(x2, p["stn"]["conv1"])
    h = lay(h, p["stn"]["conv2"])
    h = lay(h, p["stn"]["conv3"])
    g = jnp.max(h, axis=1)
    g = lay(g, p["stn"]["fc1"])
    g = lay(g, p["stn"]["fc2"])
    t = lay(g, p["stn"]["fc3"], relu=False).reshape(B, 64, 64)
    x2t = jnp.einsum("bnk,bkc->bnc", x2, t)
    x3 = lay(x2t, p["conv3"])
    x4 = lay(x3, p["conv4"])
    x5 = jnp.concatenate([x1, x2t, x3, x4], axis=-1)
    out = lay(x5, p["conv5"])
    return jnp.transpose(out, (0, 2, 1))


# ----------------------------------------------------------------------------
if __name__ == "__main__":
    B, N, n_emb_dims = 2, 200, 64
    key = jax.random.PRNGKey(0)
    k_param, k_x = jax.random.split(key)

    params_f32 = init_pointnet_params(k_param, n_emb_dims)
    kparams = cast_params_for_kernel(params_f32)
    x = jax.random.normal(k_x, (B, 3, N), dtype=jnp.float32)

    # Small tile to exercise multi-tile grid + tail-padding/masking paths.
    out = pointnet_forward(x, kparams, tile_n=64)
    out = jax.block_until_ready(out)

    assert out.shape == (B, n_emb_dims, N), out.shape
    assert bool(jnp.all(jnp.isfinite(out)))

    ref = reference_forward(x, params_f32)
    assert bool(jnp.allclose(out, ref, atol=0.15, rtol=0.05)), (
        float(jnp.max(jnp.abs(out - ref))))

    print("KERNEL_OK")
</pallas_src>

<mosaic_0001>
module attributes {stable_mosaic.version = 11 : i64} {
  func.func @_stage_a_kernel(%arg0: i32, %arg1: i32, %arg2: memref<1x64x3xf32, #tpu.memory_space<vmem>>, %arg3: memref<3x64xf32, #tpu.memory_space<vmem>>, %arg4: memref<1x64xf32, #tpu.memory_space<vmem>>, %arg5: memref<64x64xbf16, #tpu.memory_space<vmem>>, %arg6: memref<1x64xf32, #tpu.memory_space<vmem>>, %arg7: memref<64x64xbf16, #tpu.memory_space<vmem>>, %arg8: memref<1x64xf32, #tpu.memory_space<vmem>>, %arg9: memref<64x128xbf16, #tpu.memory_space<vmem>>, %arg10: memref<1x128xf32, #tpu.memory_space<vmem>>, %arg11: memref<128x1024xbf16, #tpu.memory_space<vmem>>, %arg12: memref<1x1024xf32, #tpu.memory_space<vmem>>, %arg13: memref<2x1024xf32, #tpu.memory_space<vmem>>) attributes {dimension_semantics = [#tpu.dimension_semantics<arbitrary>, #tpu.dimension_semantics<arbitrary>], iteration_bounds = array<i64: 2, 4>, scalar_prefetch = 0 : i64, scratch_operands = 0 : i64, tpu.core_type = #tpu.core_type<tc>, window_params = [{transform_indices = @transform_0, window_bounds = array<i64: 1, 64, 3>}, {pipeline_mode = #tpu.pipeline_mode<synchronous>, transform_indices = @transform_1, window_bounds = array<i64: 3, 64>}, {pipeline_mode = #tpu.pipeline_mode<synchronous>, transform_indices = @transform_2, window_bounds = array<i64: 1, 64>}, {pipeline_mode = #tpu.pipeline_mode<synchronous>, transform_indices = @transform_3, window_bounds = array<i64: 64, 64>}, {pipeline_mode = #tpu.pipeline_mode<synchronous>, transform_indices = @transform_4, window_bounds = array<i64: 1, 64>}, {pipeline_mode = #tpu.pipeline_mode<synchronous>, transform_indices = @transform_5, window_bounds = array<i64: 64, 64>}, {pipeline_mode = #tpu.pipeline_mode<synchronous>, transform_indices = @transform_6, window_bounds = array<i64: 1, 64>}, {pipeline_mode = #tpu.pipeline_mode<synchronous>, transform_indices = @transform_7, window_bounds = array<i64: 64, 128>}, {pipeline_mode = #tpu.pipeline_mode<synchronous>, transform_indices = @transform_8, window_bounds = array<i64: 1, 128>}, {pipeline_mode = #tpu.pipeline_mode<synchronous>, transform_indices = @transform_9, window_bounds = array<i64: 128, 1024>}, {pipeline_mode = #tpu.pipeline_mode<synchronous>, transform_indices = @transform_10, window_bounds = array<i64: 1, 1024>}, {pipeline_mode = #tpu.pipeline_mode<synchronous>, transform_indices = @transform_11, window_bounds = array<i64: 2, 1024>}]} {
    %c0_i32 = arith.constant 0 : i32
    %0 = arith.cmpi eq, %arg0, %c0_i32 : i32
    %c0_i32_0 = arith.constant 0 : i32
    %1 = arith.cmpi eq, %arg1, %c0_i32_0 : i32
    %2 = arith.andi %0, %1 : i1
    %3 = arith.extui %2 : i1 to i32
    %c0_i32_1 = arith.constant 0 : i32
    %4 = arith.cmpi ne, %3, %c0_i32_1 : i32
    scf.if %4 {
      %cst_39 = arith.constant 0xFF800000 : f32
      %68 = vector.broadcast %cst_39 : f32 to vector<2x1024xf32>
      %c0_40 = arith.constant 0 : index
      %c0_41 = arith.constant 0 : index
      %69 = vector.load %arg13[%c0_40, %c0_41] : memref<2x1024xf32, #tpu.memory_space<vmem>>, vector<2x1024xf32>
      tpu.vector_store %arg13[%c0_40, %c0_41], %68 {strides = array<i32>} : memref<2x1024xf32, #tpu.memory_space<vmem>>, vector<2x1024xf32>,
    } else {
    }
    %c0 = arith.constant 0 : index
    %c0_2 = arith.constant 0 : index
    %c0_3 = arith.constant 0 : index
    %5 = vector.load %arg2[%c0, %c0_2, %c0_3] : memref<1x64x3xf32, #tpu.memory_space<vmem>>, vector<1x64x3xf32>
    %6 = vector.shape_cast %5 : vector<1x64x3xf32> to vector<64x3xf32>
    %c0_4 = arith.constant 0 : index
    %c0_5 = arith.constant 0 : index
    %7 = vector.load %arg3[%c0_4, %c0_5] : memref<3x64xf32, #tpu.memory_space<vmem>>, vector<3x64xf32>
    %cst = arith.constant dense<0.000000e+00> : vector<64x64xf32>
    %8 = tpu.matmul %6, %7, %cst {dimension_numbers = #tpu.dot_dimension_numbers<[1], [0], [0], [1], [0, 0, 1, 1], [], []>} : vector<64x3xf32>, vector<3x64xf32>, vector<64x64xf32> -> vector<64x64xf32>
    %c0_6 = arith.constant 0 : index
    %c0_7 = arith.constant 0 : index
    %9 = vector.load %arg4[%c0_6, %c0_7] : memref<1x64xf32, #tpu.memory_space<vmem>>, vector<1x64xf32>
    %10 = vector.broadcast %9 : vector<1x64xf32> to vector<64x64xf32>
    %11 = arith.addf %8, %10 : vector<64x64xf32>
    %cst_8 = arith.constant 0.000000e+00 : f32
    %12 = vector.broadcast %cst_8 : f32 to vector<64x64xf32>
    %13 = arith.maximumf %11, %12 : vector<64x64xf32>
    %c0_9 = arith.constant 0 : index
    %c0_10 = arith.constant 0 : index
    %14 = vector.load %arg5[%c0_9, %c0_10] : memref<64x64xbf16, #tpu.memory_space<vmem>>, vector<64x64xbf16>
    %15 = arith.truncf %13 : vector<64x64xf32> to vector<64x64xbf16>
    %cst_11 = arith.constant dense<0.000000e+00> : vector<64x64xf32>
    %16 = tpu.matmul %15, %14, %cst_11 {dimension_numbers = #tpu.dot_dimension_numbers<[1], [0], [0], [1], [0, 0, 1, 1], [], []>} : vector<64x64xbf16>, vector<64x64xbf16>, vector<64x64xf32> -> vector<64x64xf32>
    %c0_12 = arith.constant 0 : index
    %c0_13 = arith.constant 0 : index
    %17 = vector.load %arg6[%c0_12, %c0_13] : memref<1x64xf32, #tpu.memory_space<vmem>>, vector<1x64xf32>
    %18 = vector.broadcast %17 : vector<1x64xf32> to vector<64x64xf32>
    %19 = arith.addf %16, %18 : vector<64x64xf32>
    %cst_14 = arith.constant 0.000000e+00 : f32
    %20 = vector.broadcast %cst_14 : f32 to vector<64x64xf32>
    %21 = arith.maximumf %19, %20 : vector<64x64xf32>
    %c0_15 = arith.constant 0 : index
    %c0_16 = arith.constant 0 : index
    %22 = vector.load %arg7[%c0_15, %c0_16] : memref<64x64xbf16, #tpu.memory_space<vmem>>, vector<64x64xbf16>
    %23 = arith.truncf %21 : vector<64x64xf32> to vector<64x64xbf16>
    %cst_17 = arith.constant dense<0.000000e+00> : vector<64x64xf32>
    %24 = tpu.matmul %23, %22, %cst_17 {dimension_numbers = #tpu.dot_dimension_numbers<[1], [0], [0], [1], [0, 0, 1, 1], [], []>} : vector<64x64xbf16>, vector<64x64xbf16>, vector<64x64xf32> -> vector<64x64xf32>
    %c0_18 = arith.constant 0 : index
    %c0_19 = arith.constant 0 : index
    %25 = vector.load %arg8[%c0_18, %c0_19] : memref<1x64xf32, #tpu.memory_space<vmem>>, vector<1x64xf32>
    %26 = vector.broadcast %25 : vector<1x64xf32> to vector<64x64xf32>
    %27 = arith.addf %24, %26 : vector<64x64xf32>
    %cst_20 = arith.constant 0.000000e+00 : f32
    %28 = vector.broadcast %cst_20 : f32 to vector<64x64xf32>
    %29 = arith.maximumf %27, %28 : vector<64x64xf32>
    %c0_21 = arith.constant 0 : index
    %c0_22 = arith.constant 0 : index
    %30 = vector.load %arg9[%c0_21, %c0_22] : memref<64x128xbf16, #tpu.memory_space<vmem>>, vector<64x128xbf16>
    %31 = arith.truncf %29 : vector<64x64xf32> to vector<64x64xbf16>
    %cst_23 = arith.constant dense<0.000000e+00> : vector<64x128xf32>
    %32 = tpu.matmul %31, %30, %cst_23 {dimension_numbers = #tpu.dot_dimension_numbers<[1], [0], [0], [1], [0, 0, 1, 1], [], []>} : vector<64x64xbf16>, vector<64x128xbf16>, vector<64x128xf32> -> vector<64x128xf32>
    %c0_24 = arith.constant 0 : index
    %c0_25 = arith.constant 0 : index
    %33 = vector.load %arg10[%c0_24, %c0_25] : memref<1x128xf32, #tpu.memory_space<vmem>>, vector<1x128xf32>
    %34 = vector.broadcast %33 : vector<1x128xf32> to vector<64x128xf32>
    %35 = arith.addf %32, %34 : vector<64x128xf32>
    %cst_26 = arith.constant 0.000000e+00 : f32
    %36 = vector.broadcast %cst_26 : f32 to vector<64x128xf32>
    %37 = arith.maximumf %35, %36 : vector<64x128xf32>
    %c0_27 = arith.constant 0 : index
    %c0_28 = arith.constant 0 : index
    %38 = vector.load %arg11[%c0_27, %c0_28] : memref<128x1024xbf16, #tpu.memory_space<vmem>>, vector<128x1024xbf16>
    %39 = arith.truncf %37 : vector<64x128xf32> to vector<64x128xbf16>
    %cst_29 = arith.constant dense<0.000000e+00> : vector<64x1024xf32>
    %40 = tpu.matmul %39, %38, %cst_29 {dimension_numbers = #tpu.dot_dimension_numbers<[1], [0], [0], [1], [0, 0, 1, 1], [], []>} : vector<64x128xbf16>, vector<128x1024xbf16>, vector<64x1024xf32> -> vector<64x1024xf32>
    %c0_30 = arith.constant 0 : index
    %c0_31 = arith.constant 0 : index
    %41 = vector.load %arg12[%c0_30, %c0_31] : memref<1x1024xf32, #tpu.memory_space<vmem>>, vector<1x1024xf32>
    %42 = vector.broadcast %41 : vector<1x1024xf32> to vector<64x1024xf32>
    %43 = arith.addf %40, %42 : vector<64x1024xf32>
    %cst_32 = arith.constant 0.000000e+00 : f32
    %44 = vector.broadcast %cst_32 : f32 to vector<64x1024xf32>
    %45 = arith.maximumf %43, %44 : vector<64x1024xf32>
    %c64_i32 = arith.constant 64 : i32
    %46 = arith.muli %arg1, %c64_i32 : i32
    %47 = tpu.iota {dimensions = array<i32: 0>} : vector<64x1xi32>
    %48 = vector.broadcast %46 : i32 to vector<64x1xi32>
    %49 = arith.addi %48, %47 : vector<64x1xi32>
    %c200_i32 = arith.constant 200 : i32
    %50 = vector.broadcast %c200_i32 : i32 to vector<64x1xi32>
    %51 = arith.cmpi slt, %49, %50 : vector<64x1xi32>
    %cst_33 = arith.constant 0xFF800000 : f32
    %52 = vector.shape_cast %51 : vector<64x1xi1> to vector<64x1xi1>
    %53 = vector.broadcast %52 : vector<64x1xi1> to vector<64x1024xi1>
    %54 = vector.broadcast %cst_33 : f32 to vector<64x1024xf32>
    %55 = arith.select %53, %45, %54 : vector<64x1024xi1>, vector<64x1024xf32>
    %cst_34 = arith.constant dense<0xFF800000> : vector<1024xf32>
    %56 = vector.multi_reduction <maximumf>, %55, %cst_34 [0] : vector<64x1024xf32> to vector<1024xf32>
    %57 = vector.shape_cast %56 : vector<1024xf32> to vector<1x1024xf32>
    %58 = tpu.iota {dimensions = array<i32: 0>} : vector<2x1xi32>
    %c0_35 = arith.constant 0 : index
    %c0_36 = arith.constant 0 : index
    %59 = vector.load %arg13[%c0_35, %c0_36] : memref<2x1024xf32, #tpu.memory_space<vmem>>, vector<2x1024xf32>
    %60 = vector.broadcast %arg0 : i32 to vector<2x1xi32>
    %61 = arith.cmpi eq, %58, %60 : vector<2x1xi32>
    %62 = vector.broadcast %57 : vector<1x1024xf32> to vector<2x1024xf32>
    %63 = arith.maximumf %59, %62 : vector<2x1024xf32>
    %64 = vector.shape_cast %61 : vector<2x1xi1> to vector<2x1xi1>
    %65 = vector.broadcast %64 : vector<2x1xi1> to vector<2x1024xi1>
    %66 = arith.select %65, %63, %59 : vector<2x1024xi1>, vector<2x1024xf32>
    %c0_37 = arith.constant 0 : index
    %c0_38 = arith.constant 0 : index
    %67 = vector.load %arg13[%c0_37, %c0_38] : memref<2x1024xf32, #tpu.memory_space<vmem>>, vector<2x1024xf32>
    tpu.vector_store %arg13[%c0_37, %c0_38], %66 {strides = array<i32>} : memref<2x1024xf32, #tpu.memory_space<vmem>>, vector<2x1024xf32>,
    return
  }
  func.func @transform_0(%arg0: i32, %arg1: i32) -> (i32, i32, i32) {
    %c0_i32 = arith.constant 0 : i32
    %c0_i32_0 = arith.constant 0 : i32
    return %arg0, %arg1, %c0_i32 : i32, i32, i32
  }
  func.func @transform_1(%arg0: i32, %arg1: i32) -> (i32, i32) {
    %c0_i32 = arith.constant 0 : i32
    %c0_i32_0 = arith.constant 0 : i32
    %c0_i32_1 = arith.constant 0 : i32
    return %c0_i32, %c0_i32_0 : i32, i32
  }
  func.func @transform_2(%arg0: i32, %arg1: i32) -> (i32, i32) {
    %c0_i32 = arith.constant 0 : i32
    %c0_i32_0 = arith.constant 0 : i32
    %c0_i32_1 = arith.constant 0 : i32
    return %c0_i32, %c0_i32_0 : i32, i32
  }
  func.func @transform_3(%arg0: i32, %arg1: i32) -> (i32, i32) {
    %c0_i32 = arith.constant 0 : i32
    %c0_i32_0 = arith.constant 0 : i32
    %c0_i32_1 = arith.constant 0 : i32
    return %c0_i32, %c0_i32_0 : i32, i32
  }
  func.func @transform_4(%arg0: i32, %arg1: i32) -> (i32, i32) {
    %c0_i32 = arith.constant 0 : i32
    %c0_i32_0 = arith.constant 0 : i32
    %c0_i32_1 = arith.constant 0 : i32
    return %c0_i32, %c0_i32_0 : i32, i32
  }
  func.func @transform_5(%arg0: i32, %arg1: i32) -> (i32, i32) {
    %c0_i32 = arith.constant 0 : i32
    %c0_i32_0 = arith.constant 0 : i32
    %c0_i32_1 = arith.constant 0 : i32
    return %c0_i32, %c0_i32_0 : i32, i32
  }
  func.func @transform_6(%arg0: i32, %arg1: i32) -> (i32, i32) {
    %c0_i32 = arith.constant 0 : i32
    %c0_i32_0 = arith.constant 0 : i32
    %c0_i32_1 = arith.constant 0 : i32
    return %c0_i32, %c0_i32_0 : i32, i32
  }
  func.func @transform_7(%arg0: i32, %arg1: i32) -> (i32, i32) {
    %c0_i32 = arith.constant 0 : i32
    %c0_i32_0 = arith.constant 0 : i32
    %c0_i32_1 = arith.constant 0 : i32
    return %c0_i32, %c0_i32_0 : i32, i32
  }
  func.func @transform_8(%arg0: i32, %arg1: i32) -> (i32, i32) {
    %c0_i32 = arith.constant 0 : i32
    %c0_i32_0 = arith.constant 0 : i32
    %c0_i32_1 = arith.constant 0 : i32
    return %c0_i32, %c0_i32_0 : i32, i32
  }
  func.func @transform_9(%arg0: i32, %arg1: i32) -> (i32, i32) {
    %c0_i32 = arith.constant 0 : i32
    %c0_i32_0 = arith.constant 0 : i32
    %c0_i32_1 = arith.constant 0 : i32
    return %c0_i32, %c0_i32_0 : i32, i32
  }
  func.func @transform_10(%arg0: i32, %arg1: i32) -> (i32, i32) {
    %c0_i32 = arith.constant 0 : i32
    %c0_i32_0 = arith.constant 0 : i32
    %c0_i32_1 = arith.constant 0 : i32
    return %c0_i32, %c0_i32_0 : i32, i32
  }
  func.func @transform_11(%arg0: i32, %arg1: i32) -> (i32, i32) {
    %c0_i32 = arith.constant 0 : i32
    %c0_i32_0 = arith.constant 0 : i32
    %c0_i32_1 = arith.constant 0 : i32
    return %c0_i32, %c0_i32_0 : i32, i32
  }
}

</mosaic_0001>

<llo_original>
// kernel: tpu_custom_call.1
$region0: #{tpu_custom_call.1}
  #allocation0 [shape = 'u32[]', space=smem, size = 0x4, offset = 0x4, fixed_abs, tag = 'smem constant byte address 0x4 - core index']
  #allocation1 [shape = 'u32[72,128]{1,0:T(1,128)}', space=vmem, size = 0x9000, scoped, tag = 'internal scratch']
  %s0 = inlined_call_operand.vmem [shape: f32[2,256,3], index: 0, kind: input, shape index: {}]
  %s1 = inlined_call_operand.vmem [shape: f32[3,64], index: 1, kind: input, shape index: {}]
  %s2 = inlined_call_operand.vmem [shape: f32[1,64], index: 2, kind: input, shape index: {}]
  %s3 = inlined_call_operand.hbm [shape: bf16[64,64], index: 3, kind: input, shape index: {}]
  %s4 = inlined_call_operand.vmem [shape: f32[1,64], index: 4, kind: input, shape index: {}]
  %s5 = inlined_call_operand.hbm [shape: bf16[64,64], index: 5, kind: input, shape index: {}]
  %s6 = inlined_call_operand.vmem [shape: f32[1,64], index: 6, kind: input, shape index: {}]
  %s7 = inlined_call_operand.hbm [shape: bf16[64,128], index: 7, kind: input, shape index: {}]
  %s8 = inlined_call_operand.vmem [shape: f32[1,128], index: 8, kind: input, shape index: {}]
  %s9 = inlined_call_operand.vmem [shape: bf16[128,1024], index: 9, kind: input, shape index: {}]
  %s10 = inlined_call_operand.vmem [shape: f32[1,1024], index: 10, kind: input, shape index: {}]
  %s11 = inlined_call_operand.hbm [shape: f32[2,1024], index: 11, kind: output, shape index: {}]
  %s12 = sld [smem:[#allocation0]]
  $region93: #{tpu_custom_call.1} parent=0
    _
  %s14 = ssub.s32 1, %s12
  %s15 = scalar_select 0, %s14, %s12
  $region1: #{tpu_custom_call.1} parent=0
    #allocation2 [shape = 'u8[16384]{0}', space=vmem, size = 0x4000, scoped, tag = 'input window, operand 3, single buffered']
    #allocation3 [shape = 's32[2]{0}', space=sflag, size = 0x8, scoped, tag = 'scoped memory for tpu_custom_call.1']
    #allocation4 [shape = 's32[2]{0}', space=sflag, size = 0x8, scoped, tag = 'scoped memory for tpu_custom_call.1']
    #allocation5 [shape = 'u8[16384]{0}', space=vmem, size = 0x4000, scoped, tag = 'input window, operand 5, single buffered']
    #allocation6 [shape = 's32[1]{0}', space=sflag, size = 0x4, scoped, tag = 'scoped memory for tpu_custom_call.1']
    #allocation7 [shape = 'u8[16384]{0}', space=vmem, size = 0x4000, scoped, tag = 'input window, operand 7, single buffered']
    #allocation8 [shape = 'u8[8192]{0}', space=vmem, size = 0x2000, scoped, tag = 'output window, operand 0, single buffered']
    %16 = vsyncpa [#allocation3], 0
    %17 = vsyncpa [#allocation6], 0
    %18 = vsyncpa [#allocation4], 0
    loop: start=0, step=1, limit=10
    $region2: #{tpu_custom_call.1} parent=1 // loop_pre_header
      _
    $region3: #{tpu_custom_call.1} parent=1 // loop_header
      %s20 = sphi 0, %s24
      %p21 = scmp.ge.s32.totalorder %s20, 10
      %s27 = sphi 0, %s39
      %s28 = sphi 0, %s35
      %s29 = sphi 0, %s27
      %s30 = sphi 0, %s28
      %s31 = sphi 0, %s29
      %s32 = sphi 0, %s30
      %s44 = sphi 0, %s46
      %s47 = sphi 0, %s44
      %s48 = sphi 0, %s47
      %s64 = sphi 0, %s48
      %s68 = sphi 0, %s68
      %s70 = sphi 0, %s68
      %s71 = sphi 0, %s70
      %s85 = sphi 0, %s71
      %s89 = sphi 0, %s89
      %s91 = sphi 0, %s89
      %s92 = sphi 0, %s91
      %s106 = sphi 0, %s92
      %s110 = sphi 0, %s110
      %s112 = sphi 0, %s110
      %s113 = sphi 0, %s112
      %s127 = sphi 0, %s113
      %s131 = sphi 0, %s131
      %s133 = sphi 0, %s131
      %s134 = sphi 0, %s133
      %s148 = sphi 0, %s134
      %s152 = sphi 0, %s152
      %s154 = sphi 0, %s152
      %s155 = sphi 0, %s154
      %s169 = sphi 0, %s155
      %s173 = sphi 0, %s173
      %s175 = sphi 0, %s173
      %s176 = sphi 0, %s175
      %s190 = sphi 0, %s176
      %s194 = sphi 0, %s194
      %s196 = sphi 0, %s194
      %s197 = sphi 0, %s196
      %s211 = sphi 0, %s197
      %s215 = sphi 0, %s215
      %s217 = sphi 0, %s215
      %s218 = sphi 0, %s217
      %s232 = sphi 0, %s218
      %s236 = sphi 0, %s236
      %s238 = sphi 0, %s236
      %s239 = sphi 0, %s238
      %s253 = sphi 0, %s239
      %s257 = sphi 0, %s257
      %s259 = sphi 0, %s257
      %s260 = sphi 0, %s259
      %s274 = sphi 0, %s260
      %s278 = sphi 0, %s278
      %s280 = sphi 0, %s278
      %s281 = sphi 0, %s280
      %s295 = sphi 0, %s281
    $region4: #{tpu_custom_call.1} parent=1 // loop_header_branch
      %23 = sbr.rel (%p21) target = $region8
    $region5: #{tpu_custom_call.1} parent=1 // loop_body
      %s25 = ssub.s32 %s20, 1
      %s26 = ssub.s32 %s20, 2
      %s33 = sadd.s32 1, %s28
      %p34 = scmp.ge.s32.totalorder %s33, 4
      %s35 = scalar_select %p34, 0, %s33
      %s36 = sadd.s32 1, %s27
      %s37 = scalar_select %p34, %s36, %s27
      %p38 = scmp.ge.s32.totalorder %s37, 2
      %s39 = scalar_select %p38, 0, %s37
      %s40 = ssub.s32 %s27, %s39
      %s41 = ssub.s32 %s28, %s35
      %s42 = sor.u32 %s40, %s41
      %p43 = scmp.eq.s32.totalorder %s42, 0
      %s45 = sadd.s32 %s44, 1
      %s46 = scalar_select %p43, %s44, %s45
      %p49 = pneg %p43
      %p50 = scmp.eq.s32.totalorder %s20, 7
      %p51 = por %p49, %p50
      %p52 = scmp.ne.s32.totalorder %s44, %s47
      %p53 = scmp.eq.s32.totalorder %s20, 0
      %p54 = por %p52, %p53
      %p55 = scmp.ne.s32.totalorder %s44, %s47
      %p56 = scmp.eq.s32.totalorder %s25, 7
      %p57 = por %p55, %p56
      %p58 = scmp.ne.s32.totalorder %s47, %s48
      %p59 = scmp.eq.s32.totalorder %s25, 0
      %p60 = por %p58, %p59
      %p61 = scmp.ne.s32.totalorder %s47, %s48
      %p62 = scmp.eq.s32.totalorder %s26, 7
      %p63 = por %p61, %p62
      %p65 = scmp.ne.s32.totalorder %s48, %s64
      %p66 = scmp.eq.s32.totalorder %s26, 0
      %p67 = por %p65, %p66
      %s69 = sadd.s32 %s68, 1
      %p72 = scmp.eq.s32.totalorder %s20, 7
      %p73 = scmp.ne.s32.totalorder %s68, %s70
      %p74 = scmp.eq.s32.totalorder %s20, 0
      %p75 = por %p73, %p74
      %p76 = scmp.ne.s32.totalorder %s68, %s70
      %p77 = scmp.eq.s32.totalorder %s25, 7
      %p78 = por %p76, %p77
      %p79 = scmp.ne.s32.totalorder %s70, %s71
      %p80 = scmp.eq.s32.totalorder %s25, 0
      %p81 = por %p79, %p80
      %p82 = scmp.ne.s32.totalorder %s70, %s71
      %p83 = scmp.eq.s32.totalorder %s26, 7
      %p84 = por %p82, %p83
      %p86 = scmp.ne.s32.totalorder %s71, %s85
      %p87 = scmp.eq.s32.totalorder %s26, 0
      %p88 = por %p86, %p87
      %s90 = sadd.s32 %s89, 1
      %p93 = scmp.eq.s32.totalorder %s20, 7
      %p94 = scmp.ne.s32.totalorder %s89, %s91
      %p95 = scmp.eq.s32.totalorder %s20, 0
      %p96 = por %p94, %p95
      %p97 = scmp.ne.s32.totalorder %s89, %s91
      %p98 = scmp.eq.s32.totalorder %s25, 7
      %p99 = por %p97, %p98
      %p100 = scmp.ne.s32.totalorder %s91, %s92
      %p101 = scmp.eq.s32.totalorder %s25, 0
      %p102 = por %p100, %p101
      %p103 = scmp.ne.s32.totalorder %s91, %s92
      %p104 = scmp.eq.s32.totalorder %s26, 7
      %p105 = por %p103, %p104
      %p107 = scmp.ne.s32.totalorder %s92, %s106
      %p108 = scmp.eq.s32.totalorder %s26, 0
      %p109 = por %p107, %p108
      %s111 = sadd.s32 %s110, 1
      %p114 = scmp.eq.s32.totalorder %s20, 7
      %p115 = scmp.ne.s32.totalorder %s110, %s112
      %p116 = scmp.eq.s32.totalorder %s20, 0
      %p117 = por %p115, %p116
      %p118 = scmp.ne.s32.totalorder %s110, %s112
      %p119 = scmp.eq.s32.totalorder %s25, 7
      %p120 = por %p118, %p119
      %p121 = scmp.ne.s32.totalorder %s112, %s113
      %p122 = scmp.eq.s32.totalorder %s25, 0
      %p123 = por %p121, %p122
      %p124 = scmp.ne.s32.totalorder %s112, %s113
      %p125 = scmp.eq.s32.totalorder %s26, 7
      %p126 = por %p124, %p125
      %p128 = scmp.ne.s32.totalorder %s113, %s127
      %p129 = scmp.eq.s32.totalorder %s26, 0
      %p130 = por %p128, %p129
      %s132 = sadd.s32 %s131, 1
      %p135 = scmp.eq.s32.totalorder %s20, 7
      %p136 = scmp.ne.s32.totalorder %s131, %s133
      %p137 = scmp.eq.s32.totalorder %s20, 0
      %p138 = por %p136, %p137
      %p139 = scmp.ne.s32.totalorder %s131, %s133
      %p140 = scmp.eq.s32.totalorder %s25, 7
      %p141 = por %p139, %p140
      %p142 = scmp.ne.s32.totalorder %s133, %s134
      %p143 = scmp.eq.s32.totalorder %s25, 0
      %p144 = por %p142, %p143
      %p145 = scmp.ne.s32.totalorder %s133, %s134
      %p146 = scmp.eq.s32.totalorder %s26, 7
      %p147 = por %p145, %p146
      %p149 = scmp.ne.s32.totalorder %s134, %s148
      %p150 = scmp.eq.s32.totalorder %s26, 0
      %p151 = por %p149, %p150
      %s153 = sadd.s32 %s152, 1
      %p156 = scmp.eq.s32.totalorder %s20, 7
      %p157 = scmp.ne.s32.totalorder %s152, %s154
      %p158 = scmp.eq.s32.totalorder %s20, 0
      %p159 = por %p157, %p158
      %p160 = scmp.ne.s32.totalorder %s152, %s154
      %p161 = scmp.eq.s32.totalorder %s25, 7
      %p162 = por %p160, %p161
      %p163 = scmp.ne.s32.totalorder %s154, %s155
      %p164 = scmp.eq.s32.totalorder %s25, 0
      %p165 = por %p163, %p164
      %p166 = scmp.ne.s32.totalorder %s154, %s155
      %p167 = scmp.eq.s32.totalorder %s26, 7
      %p168 = por %p166, %p167
      %p170 = scmp.ne.s32.totalorder %s155, %s169
      %p171 = scmp.eq.s32.totalorder %s26, 0
      %p172 = por %p170, %p171
      %s174 = sadd.s32 %s173, 1
      %p177 = scmp.eq.s32.totalorder %s20, 7
      %p178 = scmp.ne.s32.totalorder %s173, %s175
      %p179 = scmp.eq.s32.totalorder %s20, 0
      %p180 = por %p178, %p179
      %p181 = scmp.ne.s32.totalorder %s173, %s175
      %p182 = scmp.eq.s32.totalorder %s25, 7
      %p183 = por %p181, %p182
      %p184 = scmp.ne.s32.totalorder %s175, %s176
      %p185 = scmp.eq.s32.totalorder %s25, 0
      %p186 = por %p184, %p185
      %p187 = scmp.ne.s32.totalorder %s175, %s176
      %p188 = scmp.eq.s32.totalorder %s26, 7
      %p189 = por %p187, %p188
      %p191 = scmp.ne.s32.totalorder %s176, %s190
      %p192 = scmp.eq.s32.totalorder %s26, 0
      %p193 = por %p191, %p192
      %s195 = sadd.s32 %s194, 1
      %p198 = scmp.eq.s32.totalorder %s20, 7
      %p199 = scmp.ne.s32.totalorder %s194, %s196
      %p200 = scmp.eq.s32.totalorder %s20, 0
      %p201 = por %p199, %p200
      %p202 = scmp.ne.s32.totalorder %s194, %s196
      %p203 = scmp.eq.s32.totalorder %s25, 7
      %p204 = por %p202, %p203
      %p205 = scmp.ne.s32.totalorder %s196, %s197
      %p206 = scmp.eq.s32.totalorder %s25, 0
      %p207 = por %p205, %p206
      %p208 = scmp.ne.s32.totalorder %s196, %s197
      %p209 = scmp.eq.s32.totalorder %s26, 7
      %p210 = por %p208, %p209
      %p212 = scmp.ne.s32.totalorder %s197, %s211
      %p213 = scmp.eq.s32.totalorder %s26, 0
      %p214 = por %p212, %p213
      %s216 = sadd.s32 %s215, 1
      %p219 = scmp.eq.s32.totalorder %s20, 7
      %p220 = scmp.ne.s32.totalorder %s215, %s217
      %p221 = scmp.eq.s32.totalorder %s20, 0
      %p222 = por %p220, %p221
      %p223 = scmp.ne.s32.totalorder %s215, %s217
      %p224 = scmp.eq.s32.totalorder %s25, 7
      %p225 = por %p223, %p224
      %p226 = scmp.ne.s32.totalorder %s217, %s218
      %p227 = scmp.eq.s32.totalorder %s25, 0
      %p228 = por %p226, %p227
      %p229 = scmp.ne.s32.totalorder %s217, %s218
      %p230 = scmp.eq.s32.totalorder %s26, 7
      %p231 = por %p229, %p230
      %p233 = scmp.ne.s32.totalorder %s218, %s232
      %p234 = scmp.eq.s32.totalorder %s26, 0
      %p235 = por %p233, %p234
      %s237 = sadd.s32 %s236, 1
      %p240 = scmp.eq.s32.totalorder %s20, 7
      %p241 = scmp.ne.s32.totalorder %s236, %s238
      %p242 = scmp.eq.s32.totalorder %s20, 0
      %p243 = por %p241, %p242
      %p244 = scmp.ne.s32.totalorder %s236, %s238
      %p245 = scmp.eq.s32.totalorder %s25, 7
      %p246 = por %p244, %p245
      %p247 = scmp.ne.s32.totalorder %s238, %s239
      %p248 = scmp.eq.s32.totalorder %s25, 0
      %p249 = por %p247, %p248
      %p250 = scmp.ne.s32.totalorder %s238, %s239
      %p251 = scmp.eq.s32.totalorder %s26, 7
      %p252 = por %p250, %p251
      %p254 = scmp.ne.s32.totalorder %s239, %s253
      %p255 = scmp.eq.s32.totalorder %s26, 0
      %p256 = por %p254, %p255
      %s258 = sadd.s32 %s257, 1
      %p261 = scmp.eq.s32.totalorder %s20, 7
      %p262 = scmp.ne.s32.totalorder %s257, %s259
      %p263 = scmp.eq.s32.totalorder %s20, 0
      %p264 = por %p262, %p263
      %p265 = scmp.ne.s32.totalorder %s257, %s259
      %p266 = scmp.eq.s32.totalorder %s25, 7
      %p267 = por %p265, %p266
      %p268 = scmp.ne.s32.totalorder %s259, %s260
      %p269 = scmp.eq.s32.totalorder %s25, 0
      %p270 = por %p268, %p269
      %p271 = scmp.ne.s32.totalorder %s259, %s260
      %p272 = scmp.eq.s32.totalorder %s26, 7
      %p273 = por %p271, %p272
      %p275 = scmp.ne.s32.totalorder %s260, %s274
      %p276 = scmp.eq.s32.totalorder %s26, 0
      %p277 = por %p275, %p276
      %s279 = sadd.s32 %s278, 1
      %p282 = scmp.eq.s32.totalorder %s20, 7
      %p283 = scmp.ne.s32.totalorder %s278, %s280
      %p284 = scmp.eq.s32.totalorder %s20, 0
      %p285 = por %p283, %p284
      %p286 = scmp.ne.s32.totalorder %s278, %s280
      %p287 = scmp.eq.s32.totalorder %s25, 7
      %p288 = por %p286, %p287
      %p289 = scmp.ne.s32.totalorder %s280, %s281
      %p290 = scmp.eq.s32.totalorder %s25, 0
      %p291 = por %p289, %p290
      %p292 = scmp.ne.s32.totalorder %s280, %s281
      %p293 = scmp.eq.s32.totalorder %s26, 7
      %p294 = por %p292, %p293
      %p296 = scmp.ne.s32.totalorder %s281, %s295
      %p297 = scmp.eq.s32.totalorder %s26, 0
      %p298 = por %p296, %p297
      %p299 = scmp.le.s32.totalorder 1, %s20
      %p300 = scmp.lt.s32.totalorder %s20, 9
      %p301 = pnand %p299, %p300
      %p302 = pneg %p301
      // Predicated region
      $region9: #{tpu_custom_call.1} parent=5 // pred_check
        _
      $region10: #{tpu_custom_call.1} parent=5 // pred_check_branch
        %304 = sbr.rel (%p301) target = $region12
      $region11: #{tpu_custom_call.1} parent=5 // pred_region
        %s305 = ssub.s32 %s20, 1
        // Predicated region
        $region13: #{tpu_custom_call.1} parent=11 // pred_check
          %p306 = pneg %p81
        $region14: #{tpu_custom_call.1} parent=11 // pred_check_branch
          %308 = sbr.rel (%p306) target = $region16
        $region15: #{tpu_custom_call.1} parent=11 // pred_region
          _
        $region16: #{tpu_custom_call.1} parent=11 // pred_fallthru
          _
        // Predicated region
        $region17: #{tpu_custom_call.1} parent=11 // pred_check
          %p309 = pneg %p102
        $region18: #{tpu_custom_call.1} parent=11 // pred_check_branch
          %311 = sbr.rel (%p309) target = $region20
        $region19: #{tpu_custom_call.1} parent=11 // pred_region
          _
        $region20: #{tpu_custom_call.1} parent=11 // pred_fallthru
          _
        // Predicated region
        $region21: #{tpu_custom_call.1} parent=11 // pred_check
          %p312 = pneg %p123
        $region22: #{tpu_custom_call.1} parent=11 // pred_check_branch
          %314 = sbr.rel (%p312) target = $region24
        $region23: #{tpu_custom_call.1} parent=11 // pred_region
          %316 = vsyncadd [#allocation3], 0
          %s317 = sshll.u32 %s3, 4
          %s318 = int_to_ptr.hbm [resolvable:$true] %s317
          %s319 = sshll.u32 [#allocation2], 4
          %s320 = int_to_ptr.vmem [resolvable:$true] %s319
          %325 = dma.hbm_to_vmem [thread:$0]  %s318, 512, %s320, [#allocation3], 64, 64, 4
        $region24: #{tpu_custom_call.1} parent=11 // pred_fallthru
          _
        // Predicated region
        $region25: #{tpu_custom_call.1} parent=11 // pred_check
          %p326 = pneg %p144
        $region26: #{tpu_custom_call.1} parent=11 // pred_check_branch
          %328 = sbr.rel (%p326) target = $region28
        $region27: #{tpu_custom_call.1} parent=11 // pred_region
          _
        $region28: #{tpu_custom_call.1} parent=11 // pred_fallthru
          _
        // Predicated region
        $region29: #{tpu_custom_call.1} parent=11 // pred_check
          %p329 = pneg %p165
        $region30: #{tpu_custom_call.1} parent=11 // pred_check_branch
          %331 = sbr.rel (%p329) target = $region32
        $region31: #{tpu_custom_call.1} parent=11 // pred_region
          %333 = vsyncadd [#allocation6], 0
          %s334 = sshll.u32 %s5, 4
          %s335 = int_to_ptr.hbm [resolvable:$true] %s334
          %s336 = sshll.u32 [#allocation5], 4
          %s337 = int_to_ptr.vmem [resolvable:$true] %s336
          %342 = dma.hbm_to_vmem [thread:$0]  %s335, 512, %s337, [#allocation6], 64, 64, 4
        $region32: #{tpu_custom_call.1} parent=11 // pred_fallthru
          _
        // Predicated region
        $region33: #{tpu_custom_call.1} parent=11 // pred_check
          %p343 = pneg %p186
        $region34: #{tpu_custom_call.1} parent=11 // pred_check_branch
          %345 = sbr.rel (%p343) target = $region36
        $region35: #{tpu_custom_call.1} parent=11 // pred_region
          _
        $region36: #{tpu_custom_call.1} parent=11 // pred_fallthru
          _
        // Predicated region
        $region37: #{tpu_custom_call.1} parent=11 // pred_check
          %p346 = pneg %p207
        $region38: #{tpu_custom_call.1} parent=11 // pred_check_branch
          %348 = sbr.rel (%p346) target = $region40
        $region39: #{tpu_custom_call.1} parent=11 // pred_region
          %350 = vsyncadd [#allocation6], 0
          %s351 = sshll.u32 %s7, 4
          %s352 = int_to_ptr.hbm [resolvable:$true] %s351
          %s353 = sshll.u32 [#allocation7], 4
          %s354 = int_to_ptr.vmem [resolvable:$true] %s353
          %359 = dma.hbm_to_vmem [thread:$0]  %s352, 512, %s354, [#allocation6], 64, 64, 4
        $region40: #{tpu_custom_call.1} parent=11 // pred_fallthru
          _
        // Predicated region
        $region41: #{tpu_custom_call.1} parent=11 // pred_check
          %p360 = pneg %p228
        $region42: #{tpu_custom_call.1} parent=11 // pred_check_branch
          %362 = sbr.rel (%p360) target = $region44
        $region43: #{tpu_custom_call.1} parent=11 // pred_region
          _
        $region44: #{tpu_custom_call.1} parent=11 // pred_fallthru
          _
        // Predicated region
        $region45: #{tpu_custom_call.1} parent=11 // pred_check
          %p363 = pneg %p249
        $region46: #{tpu_custom_call.1} parent=11 // pred_check_branch
          %365 = sbr.rel (%p363) target = $region48
        $region47: #{tpu_custom_call.1} parent=11 // pred_region
          _
        $region48: #{tpu_custom_call.1} parent=11 // pred_fallthru
          _
        // Predicated region
        $region49: #{tpu_custom_call.1} parent=11 // pred_check
          %p366 = pneg %p270
        $region50: #{tpu_custom_call.1} parent=11 // pred_check_branch
          %368 = sbr.rel (%p366) target = $region52
        $region51: #{tpu_custom_call.1} parent=11 // pred_region
          _
        $region52: #{tpu_custom_call.1} parent=11 // pred_fallthru
          _
      $region12: #{tpu_custom_call.1} parent=5 // pred_fallthru
        _
      %p369 = scmp.lt.s32.totalorder %s20, 8
      // Predicated region
      $region53: #{tpu_custom_call.1} parent=5 // pred_check
        %p370 = pneg %p369
      $region54: #{tpu_custom_call.1} parent=5 // pred_check_branch
        %372 = sbr.rel (%p370) target = $region56
      $region55: #{tpu_custom_call.1} parent=5 // pred_region
        // Predicated region
        $region57: #{tpu_custom_call.1} parent=55 // pred_check
          %p373 = pneg %p54
        $region58: #{tpu_custom_call.1} parent=55 // pred_check_branch
          %375 = sbr.rel (%p373) target = $region60
        $region59: #{tpu_custom_call.1} parent=55 // pred_region
          %s376 = smul.u32 8, %s28
          %p377 = scmp.lt.s32.totalorder %s27, 1
          %s378 = scalar_select %p377, %s27, 1
          %p379 = scmp.lt.s32.totalorder %s376, 31
          %s380 = scalar_select %p379, %s376, 31
          %s381 = smul.addr %s378, 32
          %s382 = sadd.s32 %s380, %s381
          %s383 = smul.addr %s382, 8
          %s384 = scalar_lea.vmem %s0, %s383
          %s385 = smul.u32 8, %s28
        $region60: #{tpu_custom_call.1} parent=55 // pred_fallthru
          _
      $region56: #{tpu_custom_call.1} parent=5 // pred_fallthru
        _
      %p386 = scmp.le.s32.totalorder 1, %s20
      %p387 = scmp.lt.s32.totalorder %s20, 9
      %p388 = pnand %p386, %p387
      %p389 = pneg %p388
      // Predicated region
      $region61: #{tpu_custom_call.1} parent=5 // pred_check
        _
      $region62: #{tpu_custom_call.1} parent=5 // pred_check_branch
        %391 = sbr.rel (%p388) target = $region64
      $region63: #{tpu_custom_call.1} parent=5 // pred_region
        %s392 = ssub.s32 %s20, 1
        // Predicated region
        $region65: #{tpu_custom_call.1} parent=63 // pred_check
          %p393 = pneg %p123
        $region66: #{tpu_custom_call.1} parent=63 // pred_check_branch
          %395 = sbr.rel (%p393) target = $region68
        $region67: #{tpu_custom_call.1} parent=63 // pred_region
          %397 = dma.done [#allocation3], 512
        $region68: #{tpu_custom_call.1} parent=63 // pred_fallthru
          _
        // Predicated region
        $region69: #{tpu_custom_call.1} parent=63 // pred_check
          %p398 = pneg %p165
        $region70: #{tpu_custom_call.1} parent=63 // pred_check_branch
          %400 = sbr.rel (%p398) target = $region72
        $region71: #{tpu_custom_call.1} parent=63 // pred_region
          %402 = dma.done [#allocation6], 512
        $region72: #{tpu_custom_call.1} parent=63 // pred_fallthru
          _
        // Predicated region
        $region73: #{tpu_custom_call.1} parent=63 // pred_check
          %p403 = pneg %p207
        $region74: #{tpu_custom_call.1} parent=63 // pred_check_branch
          %405 = sbr.rel (%p403) target = $region76
        $region75: #{tpu_custom_call.1} parent=63 // pred_region
          %407 = dma.done [#allocation6], 512
        $region76: #{tpu_custom_call.1} parent=63 // pred_fallthru
          _
        %s408 = smul.u32 8, %s30
        %p409 = scmp.lt.s32.totalorder %s29, 1
        %s410 = scalar_select %p409, %s29, 1
        %p411 = scmp.lt.s32.totalorder %s408, 31
        %s412 = scalar_select %p411, %s408, 31
        %s413 = smul.addr %s410, 32
        %s414 = sadd.s32 %s412, %s413
        %s415 = smul.addr %s414, 8
        %s416 = scalar_lea.vmem %s0, %s415
        %p417 = pneg %p60
        %p418 = pneg %p57
        %p419 = pneg %p81
        %p420 = pneg %p78
        %p421 = pneg %p102
        %p422 = pneg %p99
        %p423 = pneg %p123
        %p424 = pneg %p120
        %p425 = pneg %p144
        %p426 = pneg %p141
        %p427 = pneg %p165
        %p428 = pneg %p162
        %p429 = pneg %p186
        %p430 = pneg %p183
        %p431 = pneg %p207
        %p432 = pneg %p204
        %p433 = pneg %p228
        %p434 = pneg %p225
        %p435 = pneg %p249
        %p436 = pneg %p246
        %p437 = pneg %p270
        %p438 = pneg %p267
        %p439 = pneg %p291
        %p440 = pneg %p288
        %s441 = smul.u32 8, %s30
        %p442 = scmp.lt.s32.totalorder %s29, 1
        %s443 = scalar_select %p442, %s29, 1
        %p444 = scmp.lt.s32.totalorder %s441, 31
        %s445 = scalar_select %p444, %s441, 31
        %s446 = smul.addr %s443, 32
        %s447 = sadd.s32 %s445, %s446
        %s448 = smul.addr %s447, 8
        %s449 = scalar_lea.vmem %s0, %s448
        %s450 = smul.u32 8, %s30
        %p452 = scmp.eq.s32.totalorder %s29, 0
        %p453 = scmp.eq.s32.totalorder %s30, 0
        %p454 = pnand %p452, %p453
        %p455 = pneg %p454
        // Predicated region
        $region77: #{tpu_custom_call.1} parent=63 // pred_check
          _
        $region78: #{tpu_custom_call.1} parent=63 // pred_check_branch
          %457 = sbr.rel (%p454) target = $region80
        $region79: #{tpu_custom_call.1} parent=63 // pred_region
          %458 = vst [vmem:[#allocation8] sm:$0xff] -inf
          %459 = vst [vmem:[#allocation8 + $0x8] sm:$0xff] -inf
        $region80: #{tpu_custom_call.1} parent=63 // pred_fallthru
          _
        %v460 = vld [vmem:[%s449] sm:$0xff]
        %v461 = vld [vmem:[%s449 + $0x8] sm:$0xff]
        %v462 = vld [vmem:[%s449 + $0x10] sm:$0xff]
        %v463 = vld [vmem:[%s449 + $0x18] sm:$0xff]
        %v464 = vld [vmem:[%s449 + $0x20] sm:$0xff]
        %v465 = vld [vmem:[%s449 + $0x28] sm:$0xff]
        %v466 = vld [vmem:[%s449 + $0x30] sm:$0xff]
        %v467 = vld [vmem:[%s449 + $0x38] sm:$0xff]
        %v468 = vld [vmem:[%s1] sm:$0x7]
        %v469 = vld [vmem:[%s2] sm:$0x1]
        %v471 = vperm.slane %v469, 0
        %vm473 = vcmask 23552
        %v475 = vsel %vm473, %v460, 0
        %v478 = vsel %vm473, %v461, 0
        %v481 = vsel %vm473, %v462, 0
        %v484 = vsel %vm473, %v463, 0
        %v487 = vsel %vm473, %v464, 0
        %v490 = vsel %vm473, %v465, 0
        %v493 = vsel %vm473, %v466, 0
        %v496 = vsel %vm473, %v467, 0
        %vm498 = vcmask 1042432
        %v500 = vsel %vm498, %v468, 0
        %502 = vmatpush.msra.mxu0 0.0
        %503 = vmatpush.msra.mxu0 0.0
        %504 = vmatpush.msra.mxu0 0.0
        %505 = vmatpush.msra.mxu0 0.0
        %506 = vmatpush.msra.mxu0 0.0
        %507 = vmatpush.msra.mxu0 0.0
        %508 = vmatpush.msra.mxu0 0.0
        %509 = vmatpush.msra.mxu0 0.0
        %510 = vmatpush.msra.mxu0 0.0
        %511 = vmatpush.msra.mxu0 0.0
        %512 = vmatpush.msra.mxu0 0.0
        %513 = vmatpush.msra.mxu0 0.0
        %514 = vmatpush.msra.mxu0 0.0
        %515 = vmatpush.msra.mxu0 0.0
        %516 = vmatpush.msra.mxu0 0.0
        %517 = vmatpush.msra.mxu0 %v500
        %518 = vmatmul.f32.gmra.mxu0 %v475
        %v519 = vpop.f32.mrf.mxu0
        %v520 = vadd.f32 %v471, %v519
        %521 = vmatmul.f32.gmra.mxu0 %v478
        %v522 = vpop.f32.mrf.mxu0
        %v523 = vadd.f32 %v471, %v522
        %524 = vmatmul.f32.gmra.mxu0 %v481
        %v525 = vpop.f32.mrf.mxu0
        %v526 = vadd.f32 %v471, %v525
        %527 = vmatmul.f32.gmra.mxu0 %v484
        %v528 = vpop.f32.mrf.mxu0
        %v529 = vadd.f32 %v471, %v528
        %530 = vmatmul.f32.gmra.mxu0 %v487
        %v531 = vpop.f32.mrf.mxu0
        %v532 = vadd.f32 %v471, %v531
        %533 = vmatmul.f32.gmra.mxu0 %v490
        %v534 = vpop.f32.mrf.mxu0
        %v535 = vadd.f32 %v471, %v534
        %536 = vmatmul.f32.gmra.mxu0 %v493
        %v537 = vpop.f32.mrf.mxu0
        %v538 = vadd.f32 %v471, %v537
        %539 = vmatmul.f32.gmra.mxu0 %v496
        %v540 = vpop.f32.mrf.mxu0
        %v541 = vadd.f32 %v471, %v540
        %542 = vdwg.mxu0
        %v543 = vmax.f32 %v520, 0.0
        %v544 = vmax.f32 %v523, 0.0
        %v545 = vmax.f32 %v526, 0.0
        %v546 = vmax.f32 %v529, 0.0
        %v547 = vmax.f32 %v532, 0.0
        %v548 = vmax.f32 %v535, 0.0
        %v549 = vmax.f32 %v538, 0.0
        %v550 = vmax.f32 %v541, 0.0
        %v551 = vld [vmem:[#allocation2] sm:$0xf]
        %v552 = vld [vmem:[#allocation2 + $0x4] sm:$0xf]
        %v553 = vld [vmem:[#allocation2 + $0x8] sm:$0xf]
        %v554 = vld [vmem:[#allocation2 + $0xc] sm:$0xf]
        %v555 = vld [vmem:[#allocation2 + $0x10] sm:$0xf]
        %v556 = vld [vmem:[#allocation2 + $0x14] sm:$0xf]
        %v557 = vld [vmem:[#allocation2 + $0x18] sm:$0xf]
        %v558 = vld [vmem:[#allocation2 + $0x1c] sm:$0xf]
        %v559 = vpack.c.bf16 %v544, %v543
        %v560 = vpack.c.bf16 %v546, %v545
        %v561 = vpack.c.bf16 %v548, %v547
        %v562 = vpack.c.bf16 %v550, %v549
        %v563 = vld [vmem:[%s4] sm:$0x1]
        %v565 = vperm.slane %v563, 0
        %v575 = vunpack.c.l.b16 %v551
        %v576 = vunpack.c.l.b16 %v552
        %v577 = vunpack.c.l.b16 %v553
        %v578 = vunpack.c.l.b16 %v554
        %v579 = vunpack.c.l.b16 %v555
        %v580 = vunpack.c.l.b16 %v556
        %v581 = vunpack.c.l.b16 %v557
        %v582 = vunpack.c.l.b16 %v558
        %v583 = vpack.c.b16 %v576, %v575
        %v584 = vpack.c.b16 %v578, %v577
        %v585 = vpack.c.b16 %v580, %v579
        %v586 = vpack.c.b16 %v582, %v581
        %vm591 = vcmask 523264
        %v593 = vsel %vm591, %v559, 0
        %v596 = vsel %vm591, %v560, 0
        %v599 = vsel %vm591, %v561, 0
        %v602 = vsel %vm591, %v562, 0
        %604 = vmatpush.bf16.msra.mxu0 0
        %605 = vmatpush.bf16.msra.mxu0 0
        %606 = vmatpush.bf16.msra.mxu0 0
        %607 = vmatpush.bf16.msra.mxu0 0
        %608 = vmatpush.bf16.msra.mxu0 %v586
        %609 = vmatpush.bf16.msra.mxu0 %v585
        %610 = vmatpush.bf16.msra.mxu0 %v584
        %611 = vmatpush.bf16.msra.mxu0 %v583
        %612 = vmatmul.bf16.gmra.mxu0 %v593
        %v613 = vpop.f32.mrf.mxu0
        %v614 = vadd.f32 %v565, %v613
        %v615 = vpop.f32.mrf.mxu0
        %v616 = vadd.f32 %v565, %v615
        %617 = vmatmul.bf16.gmra.mxu0 %v596
        %v618 = vpop.f32.mrf.mxu0
        %v619 = vadd.f32 %v565, %v618
        %v620 = vpop.f32.mrf.mxu0
        %v621 = vadd.f32 %v565, %v620
        %622 = vmatmul.bf16.gmra.mxu0 %v599
        %v623 = vpop.f32.mrf.mxu0
        %v624 = vadd.f32 %v565, %v623
        %v625 = vpop.f32.mrf.mxu0
        %v626 = vadd.f32 %v565, %v625
        %627 = vmatmul.bf16.gmra.mxu0 %v602
        %v628 = vpop.f32.mrf.mxu0
        %v629 = vadd.f32 %v565, %v628
        %v630 = vpop.f32.mrf.mxu0
        %v631 = vadd.f32 %v565, %v630
        %632 = vdwg.mxu0
        %v633 = vmax.f32 %v614, 0.0
        %v634 = vmax.f32 %v616, 0.0
        %v635 = vmax.f32 %v619, 0.0
        %v636 = vmax.f32 %v621, 0.0
        %v637 = vmax.f32 %v624, 0.0
        %v638 = vmax.f32 %v626, 0.0
        %v639 = vmax.f32 %v629, 0.0
        %v640 = vmax.f32 %v631, 0.0
        %v641 = vld [vmem:[#allocation5] sm:$0xf]
        %v642 = vld [vmem:[#allocation5 + $0x4] sm:$0xf]
        %v643 = vld [vmem:[#allocation5 + $0x8] sm:$0xf]
        %v644 = vld [vmem:[#allocation5 + $0xc] sm:$0xf]
        %v645 = vld [vmem:[#allocation5 + $0x10] sm:$0xf]
        %v646 = vld [vmem:[#allocation5 + $0x14] sm:$0xf]
        %v647 = vld [vmem:[#allocation5 + $0x18] sm:$0xf]
        %v648 = vld [vmem:[#allocation5 + $0x1c] sm:$0xf]
        %v649 = vpack.c.bf16 %v634, %v633
        %v650 = vpack.c.bf16 %v636, %v635
        %v651 = vpack.c.bf16 %v638, %v637
        %v652 = vpack.c.bf16 %v640, %v639
        %v653 = vld [vmem:[%s6] sm:$0x1]
        %v655 = vperm.slane %v653, 0
        %v665 = vunpack.c.l.b16 %v641
        %v666 = vunpack.c.l.b16 %v642
        %v667 = vunpack.c.l.b16 %v643
        %v668 = vunpack.c.l.b16 %v644
        %v669 = vunpack.c.l.b16 %v645
        %v670 = vunpack.c.l.b16 %v646
        %v671 = vunpack.c.l.b16 %v647
        %v672 = vunpack.c.l.b16 %v648
        %v673 = vpack.c.b16 %v666, %v665
        %v674 = vpack.c.b16 %v668, %v667
        %v675 = vpack.c.b16 %v670, %v669
        %v676 = vpack.c.b16 %v672, %v671
        %v682 = vsel %vm591, %v649, 0
        %v685 = vsel %vm591, %v650, 0
        %v688 = vsel %vm591, %v651, 0
        %v691 = vsel %vm591, %v652, 0
        %693 = vmatpush.bf16.msra.mxu0 0
        %694 = vmatpush.bf16.msra.mxu0 0
        %695 = vmatpush.bf16.msra.mxu0 0
        %696 = vmatpush.bf16.msra.mxu0 0
        %697 = vmatpush.bf16.msra.mxu0 %v676
        %698 = vmatpush.bf16.msra.mxu0 %v675
        %699 = vmatpush.bf16.msra.mxu0 %v674
        %700 = vmatpush.bf16.msra.mxu0 %v673
        %701 = vmatmul.bf16.gmra.mxu0 %v682
        %v702 = vpop.f32.mrf.mxu0
        %v703 = vadd.f32 %v655, %v702
        %v704 = vpop.f32.mrf.mxu0
        %v705 = vadd.f32 %v655, %v704
        %706 = vmatmul.bf16.gmra.mxu0 %v685
        %v707 = vpop.f32.mrf.mxu0
        %v708 = vadd.f32 %v655, %v707
        %v709 = vpop.f32.mrf.mxu0
        %v710 = vadd.f32 %v655, %v709
        %711 = vmatmul.bf16.gmra.mxu0 %v688
        %v712 = vpop.f32.mrf.mxu0
        %v713 = vadd.f32 %v655, %v712
        %v714 = vpop.f32.mrf.mxu0
        %v715 = vadd.f32 %v655, %v714
        %716 = vmatmul.bf16.gmra.mxu0 %v691
        %v717 = vpop.f32.mrf.mxu0
        %v718 = vadd.f32 %v655, %v717
        %v719 = vpop.f32.mrf.mxu0
        %v720 = vadd.f32 %v655, %v719
        %721 = vdwg.mxu0
        %v722 = vmax.f32 %v703, 0.0
        %v723 = vmax.f32 %v705, 0.0
        %v724 = vmax.f32 %v708, 0.0
        %v725 = vmax.f32 %v710, 0.0
        %v726 = vmax.f32 %v713, 0.0
        %v727 = vmax.f32 %v715, 0.0
        %v728 = vmax.f32 %v718, 0.0
        %v729 = vmax.f32 %v720, 0.0
        %v730 = vld [vmem:[#allocation7] sm:$0xf]
        %v731 = vld [vmem:[#allocation7 + $0x4] sm:$0xf]
        %v732 = vld [vmem:[#allocation7 + $0x8] sm:$0xf]
        %v733 = vld [vmem:[#allocation7 + $0xc] sm:$0xf]
        %v734 = vld [vmem:[#allocation7 + $0x10] sm:$0xf]
        %v735 = vld [vmem:[#allocation7 + $0x14] sm:$0xf]
        %v736 = vld [vmem:[#allocation7 + $0x18] sm:$0xf]
        %v737 = vld [vmem:[#allocation7 + $0x1c] sm:$0xf]
        %v738 = vpack.c.bf16 %v723, %v722
        %v739 = vpack.c.bf16 %v725, %v724
        %v740 = vpack.c.bf16 %v727, %v726
        %v741 = vpack.c.bf16 %v729, %v728
        %v742 = vld [vmem:[%s8] sm:$0x1]
        %v744 = vperm.slane %v742, 0
        %v754 = vunpack.c.l.b16 %v730
        %v755 = vunpack.c.l.b16 %v731
        %v756 = vunpack.c.l.b16 %v732
        %v757 = vunpack.c.l.b16 %v733
        %v758 = vunpack.c.l.b16 %v734
        %v759 = vunpack.c.l.b16 %v735
        %v760 = vunpack.c.l.b16 %v736
        %v761 = vunpack.c.l.b16 %v737
        %v762 = vpack.c.b16 %v755, %v754
        %v763 = vpack.c.b16 %v757, %v756
        %v764 = vpack.c.b16 %v759, %v758
        %v765 = vpack.c.b16 %v761, %v760
        %v771 = vsel %vm591, %v738, 0
        %v774 = vsel %vm591, %v739, 0
        %v777 = vsel %vm591, %v740, 0
        %v780 = vsel %vm591, %v741, 0
        %782 = vmatpush.bf16.msra.mxu0 0
        %783 = vmatpush.bf16.msra.mxu0 0
        %784 = vmatpush.bf16.msra.mxu0 0
        %785 = vmatpush.bf16.msra.mxu0 0
        %786 = vmatpush.bf16.msra.mxu0 %v765
        %787 = vmatpush.bf16.msra.mxu0 %v764
        %788 = vmatpush.bf16.msra.mxu0 %v763
        %789 = vmatpush.bf16.msra.mxu0 %v762
        %790 = vmatmul.bf16.gmra.mxu0 %v771
        %v791 = vpop.f32.mrf.mxu0
        %v792 = vadd.f32 %v744, %v791
        %v793 = vpop.f32.mrf.mxu0
        %v794 = vadd.f32 %v744, %v793
        %795 = vmatmul.bf16.gmra.mxu0 %v774
        %v796 = vpop.f32.mrf.mxu0
        %v797 = vadd.f32 %v744, %v796
        %v798 = vpop.f32.mrf.mxu0
        %v799 = vadd.f32 %v744, %v798
        %800 = vmatmul.bf16.gmra.mxu0 %v777
        %v801 = vpop.f32.mrf.mxu0
        %v802 = vadd.f32 %v744, %v801
        %v803 = vpop.f32.mrf.mxu0
        %v804 = vadd.f32 %v744, %v803
        %805 = vmatmul.bf16.gmra.mxu0 %v780
        %v806 = vpop.f32.mrf.mxu0
        %v807 = vadd.f32 %v744, %v806
        %v808 = vpop.f32.mrf.mxu0
        %v809 = vadd.f32 %v744, %v808
        %810 = vdwg.mxu0
        %v811 = vmax.f32 %v792, 0.0
        %v812 = vmax.f32 %v794, 0.0
        %v813 = vmax.f32 %v797, 0.0
        %v814 = vmax.f32 %v799, 0.0
        %v815 = vmax.f32 %v802, 0.0
        %v816 = vmax.f32 %v804, 0.0
        %v817 = vmax.f32 %v807, 0.0
        %v818 = vmax.f32 %v809, 0.0
        %v819 = vld [vmem:[%s9] sm:$0xff]
        %v820 = vld [vmem:[%s9 + $0x8] sm:$0xff]
        %v821 = vld [vmem:[%s9 + $0x10] sm:$0xff]
        %v822 = vld [vmem:[%s9 + $0x18] sm:$0xff]
        %v823 = vld [vmem:[%s9 + $0x20] sm:$0xff]
        %v824 = vld [vmem:[%s9 + $0x28] sm:$0xff]
        %v825 = vld [vmem:[%s9 + $0x30] sm:$0xff]
        %v826 = vld [vmem:[%s9 + $0x38] sm:$0xff]
        %v827 = vld [vmem:[%s9 + $0x40] sm:$0xff]
        %v828 = vld [vmem:[%s9 + $0x48] sm:$0xff]
        %v829 = vld [vmem:[%s9 + $0x50] sm:$0xff]
        %v830 = vld [vmem:[%s9 + $0x58] sm:$0xff]
        %v831 = vld [vmem:[%s9 + $0x60] sm:$0xff]
        %v832 = vld [vmem:[%s9 + $0x68] sm:$0xff]
        %v833 = vld [vmem:[%s9 + $0x70] sm:$0xff]
        %v834 = vld [vmem:[%s9 + $0x78] sm:$0xff]
        %v835 = vld [vmem:[%s9 + $0x80] sm:$0xff]
        %v836 = vld [vmem:[%s9 + $0x88] sm:$0xff]
        %v837 = vld [vmem:[%s9 + $0x90] sm:$0xff]
        %v838 = vld [vmem:[%s9 + $0x98] sm:$0xff]
        %v839 = vld [vmem:[%s9 + $0xa0] sm:$0xff]
        %v840 = vld [vmem:[%s9 + $0xa8] sm:$0xff]
        %v841 = vld [vmem:[%s9 + $0xb0] sm:$0xff]
        %v842 = vld [vmem:[%s9 + $0xb8] sm:$0xff]
        %v843 = vld [vmem:[%s9 + $0xc0] sm:$0xff]
        %v844 = vld [vmem:[%s9 + $0xc8] sm:$0xff]
        %v845 = vld [vmem:[%s9 + $0xd0] sm:$0xff]
        %v846 = vld [vmem:[%s9 + $0xd8] sm:$0xff]
        %v847 = vld [vmem:[%s9 + $0xe0] sm:$0xff]
        %v848 = vld [vmem:[%s9 + $0xe8] sm:$0xff]
        %v849 = vld [vmem:[%s9 + $0xf0] sm:$0xff]
        %v850 = vld [vmem:[%s9 + $0xf8] sm:$0xff]
        %v851 = vld [vmem:[%s9 + $0x100] sm:$0xff]
        %v852 = vld [vmem:[%s9 + $0x108] sm:$0xff]
        %v853 = vld [vmem:[%s9 + $0x110] sm:$0xff]
        %v854 = vld [vmem:[%s9 + $0x118] sm:$0xff]
        %v855 = vld [vmem:[%s9 + $0x120] sm:$0xff]
        %v856 = vld [vmem:[%s9 + $0x128] sm:$0xff]
        %v857 = vld [vmem:[%s9 + $0x130] sm:$0xff]
        %v858 = vld [vmem:[%s9 + $0x138] sm:$0xff]
        %v859 = vld [vmem:[%s9 + $0x140] sm:$0xff]
        %v860 = vld [vmem:[%s9 + $0x148] sm:$0xff]
        %v861 = vld [vmem:[%s9 + $0x150] sm:$0xff]
        %v862 = vld [vmem:[%s9 + $0x158] sm:$0xff]
        %v863 = vld [vmem:[%s9 + $0x160] sm:$0xff]
        %v864 = vld [vmem:[%s9 + $0x168] sm:$0xff]
        %v865 = vld [vmem:[%s9 + $0x170] sm:$0xff]
        %v866 = vld [vmem:[%s9 + $0x178] sm:$0xff]
        %v867 = vld [vmem:[%s9 + $0x180] sm:$0xff]
        %v868 = vld [vmem:[%s9 + $0x188] sm:$0xff]
        %v869 = vld [vmem:[%s9 + $0x190] sm:$0xff]
        %v870 = vld [vmem:[%s9 + $0x198] sm:$0xff]
        %v871 = vld [vmem:[%s9 + $0x1a0] sm:$0xff]
        %v872 = vld [vmem:[%s9 + $0x1a8] sm:$0xff]
        %v873 = vld [vmem:[%s9 + $0x1b0] sm:$0xff]
        %v874 = vld [vmem:[%s9 + $0x1b8] sm:$0xff]
        %v875 = vld [vmem:[%s9 + $0x1c0] sm:$0xff]
        %v876 = vld [vmem:[%s9 + $0x1c8] sm:$0xff]
        %v877 = vld [vmem:[%s9 + $0x1d0] sm:$0xff]
        %v878 = vld [vmem:[%s9 + $0x1d8] sm:$0xff]
        %v879 = vld [vmem:[%s9 + $0x1e0] sm:$0xff]
        %v880 = vld [vmem:[%s9 + $0x1e8] sm:$0xff]
        %v881 = vld [vmem:[%s9 + $0x1f0] sm:$0xff]
        %v882 = vld [vmem:[%s9 + $0x1f8] sm:$0xff]
        %v883 = vpack.c.bf16 %v812, %v811
        %v884 = vpack.c.bf16 %v814, %v813
        %v885 = vpack.c.bf16 %v816, %v815
        %v886 = vpack.c.bf16 %v818, %v817
        %v887 = vld [vmem:[%s10] sm:$0xff]
        %v889 = vperm.slane %v887, 0
        %v890 = vperm.slane %v887, 1
        %v891 = vperm.slane %v887, 2
        %v892 = vperm.slane %v887, 3
        %v893 = vperm.slane %v887, 4
        %v894 = vperm.slane %v887, 5
        %v895 = vperm.slane %v887, 6
        %v896 = vperm.slane %v887, 7
        %v969 = vunpack.c.l.b16 %v819
        %v970 = vunpack.c.h.b16 %v819
        %v971 = vunpack.c.l.b16 %v820
        %v972 = vunpack.c.h.b16 %v820
        %v973 = vunpack.c.l.b16 %v821
        %v974 = vunpack.c.h.b16 %v821
        %v975 = vunpack.c.l.b16 %v822
        %v976 = vunpack.c.h.b16 %v822
        %v977 = vunpack.c.l.b16 %v823
        %v978 = vunpack.c.h.b16 %v823
        %v979 = vunpack.c.l.b16 %v824
        %v980 = vunpack.c.h.b16 %v824
        %v981 = vunpack.c.l.b16 %v825
        %v982 = vunpack.c.h.b16 %v825
        %v983 = vunpack.c.l.b16 %v826
        %v984 = vunpack.c.h.b16 %v826
        %v985 = vunpack.c.l.b16 %v827
        %v986 = vunpack.c.h.b16 %v827
        %v987 = vunpack.c.l.b16 %v828
        %v988 = vunpack.c.h.b16 %v828
        %v989 = vunpack.c.l.b16 %v829
        %v990 = vunpack.c.h.b16 %v829
        %v991 = vunpack.c.l.b16 %v830
        %v992 = vunpack.c.h.b16 %v830
        %v993 = vunpack.c.l.b16 %v831
        %v994 = vunpack.c.h.b16 %v831
        %v995 = vunpack.c.l.b16 %v832
        %v996 = vunpack.c.h.b16 %v832
        %v997 = vunpack.c.l.b16 %v833
        %v998 = vunpack.c.h.b16 %v833
        %v999 = vunpack.c.l.b16 %v834
        %v1000 = vunpack.c.h.b16 %v834
        %v1001 = vunpack.c.l.b16 %v835
        %v1002 = vunpack.c.h.b16 %v835
        %v1003 = vunpack.c.l.b16 %v836
        %v1004 = vunpack.c.h.b16 %v836
        %v1005 = vunpack.c.l.b16 %v837
        %v1006 = vunpack.c.h.b16 %v837
        %v1007 = vunpack.c.l.b16 %v838
        %v1008 = vunpack.c.h.b16 %v838
        %v1009 = vunpack.c.l.b16 %v839
        %v1010 = vunpack.c.h.b16 %v839
        %v1011 = vunpack.c.l.b16 %v840
        %v1012 = vunpack.c.h.b16 %v840
        %v1013 = vunpack.c.l.b16 %v841
        %v1014 = vunpack.c.h.b16 %v841
        %v1015 = vunpack.c.l.b16 %v842
        %v1016 = vunpack.c.h.b16 %v842
        %v1017 = vunpack.c.l.b16 %v843
        %v1018 = vunpack.c.h.b16 %v843
        %v1019 = vunpack.c.l.b16 %v844
        %v1020 = vunpack.c.h.b16 %v844
        %v1021 = vunpack.c.l.b16 %v845
        %v1022 = vunpack.c.h.b16 %v845
        %v1023 = vunpack.c.l.b16 %v846
        %v1024 = vunpack.c.h.b16 %v846
        %v1025 = vunpack.c.l.b16 %v847
        %v1026 = vunpack.c.h.b16 %v847
        %v1027 = vunpack.c.l.b16 %v848
        %v1028 = vunpack.c.h.b16 %v848
        %v1029 = vunpack.c.l.b16 %v849
        %v1030 = vunpack.c.h.b16 %v849
        %v1031 = vunpack.c.l.b16 %v850
        %v1032 = vunpack.c.h.b16 %v850
        %v1033 = vunpack.c.l.b16 %v851
        %v1034 = vunpack.c.h.b16 %v851
        %v1035 = vunpack.c.l.b16 %v852
        %v1036 = vunpack.c.h.b16 %v852
        %v1037 = vunpack.c.l.b16 %v853
        %v1038 = vunpack.c.h.b16 %v853
        %v1039 = vunpack.c.l.b16 %v854
        %v1040 = vunpack.c.h.b16 %v854
        %v1041 = vunpack.c.l.b16 %v855
        %v1042 = vunpack.c.h.b16 %v855
        %v1043 = vunpack.c.l.b16 %v856
        %v1044 = vunpack.c.h.b16 %v856
        %v1045 = vunpack.c.l.b16 %v857
        %v1046 = vunpack.c.h.b16 %v857
        %v1047 = vunpack.c.l.b16 %v858
        %v1048 = vunpack.c.h.b16 %v858
        %v1049 = vunpack.c.l.b16 %v859
        %v1050 = vunpack.c.h.b16 %v859
        %v1051 = vunpack.c.l.b16 %v860
        %v1052 = vunpack.c.h.b16 %v860
        %v1053 = vunpack.c.l.b16 %v861
        %v1054 = vunpack.c.h.b16 %v861
        %v1055 = vunpack.c.l.b16 %v862
        %v1056 = vunpack.c.h.b16 %v862
        %v1057 = vunpack.c.l.b16 %v863
        %v1058 = vunpack.c.h.b16 %v863
        %v1059 = vunpack.c.l.b16 %v864
        %v1060 = vunpack.c.h.b16 %v864
        %v1061 = vunpack.c.l.b16 %v865
        %v1062 = vunpack.c.h.b16 %v865
        %v1063 = vunpack.c.l.b16 %v866
        %v1064 = vunpack.c.h.b16 %v866
        %v1065 = vunpack.c.l.b16 %v867
        %v1066 = vunpack.c.h.b16 %v867
        %v1067 = vunpack.c.l.b16 %v868
        %v1068 = vunpack.c.h.b16 %v868
        %v1069 = vunpack.c.l.b16 %v869
        %v1070 = vunpack.c.h.b16 %v869
        %v1071 = vunpack.c.l.b16 %v870
        %v1072 = vunpack.c.h.b16 %v870
        %v1073 = vunpack.c.l.b16 %v871
        %v1074 = vunpack.c.h.b16 %v871
        %v1075 = vunpack.c.l.b16 %v872
        %v1076 = vunpack.c.h.b16 %v872
        %v1077 = vunpack.c.l.b16 %v873
        %v1078 = vunpack.c.h.b16 %v873
        %v1079 = vunpack.c.l.b16 %v874
        %v1080 = vunpack.c.h.b16 %v874
        %v1081 = vunpack.c.l.b16 %v875
        %v1082 = vunpack.c.h.b16 %v875
        %v1083 = vunpack.c.l.b16 %v876
        %v1084 = vunpack.c.h.b16 %v876
        %v1085 = vunpack.c.l.b16 %v877
        %v1086 = vunpack.c.h.b16 %v877
        %v1087 = vunpack.c.l.b16 %v878
        %v1088 = vunpack.c.h.b16 %v878
        %v1089 = vunpack.c.l.b16 %v879
        %v1090 = vunpack.c.h.b16 %v879
        %v1091 = vunpack.c.l.b16 %v880
        %v1092 = vunpack.c.h.b16 %v880
        %v1093 = vunpack.c.l.b16 %v881
        %v1094 = vunpack.c.h.b16 %v881
        %v1095 = vunpack.c.l.b16 %v882
        %v1096 = vunpack.c.h.b16 %v882
        %v1097 = vpack.c.b16 %v977, %v969
        %v1098 = vpack.c.b16 %v978, %v970
        %v1099 = vpack.c.b16 %v979, %v971
        %v1100 = vpack.c.b16 %v980, %v972
        %v1101 = vpack.c.b16 %v981, %v973
        %v1102 = vpack.c.b16 %v982, %v974
        %v1103 = vpack.c.b16 %v983, %v975
        %v1104 = vpack.c.b16 %v984, %v976
        %v1105 = vpack.c.b16 %v993, %v985
        %v1106 = vpack.c.b16 %v994, %v986
        %v1107 = vpack.c.b16 %v995, %v987
        %v1108 = vpack.c.b16 %v996, %v988
        %v1109 = vpack.c.b16 %v997, %v989
        %v1110 = vpack.c.b16 %v998, %v990
        %v1111 = vpack.c.b16 %v999, %v991
        %v1112 = vpack.c.b16 %v1000, %v992
        %v1113 = vpack.c.b16 %v1009, %v1001
        %v1114 = vpack.c.b16 %v1010, %v1002
        %v1115 = vpack.c.b16 %v1011, %v1003
        %v1116 = vpack.c.b16 %v1012, %v1004
        %v1117 = vpack.c.b16 %v1013, %v1005
        %v1118 = vpack.c.b16 %v1014, %v1006
        %v1119 = vpack.c.b16 %v1015, %v1007
        %v1120 = vpack.c.b16 %v1016, %v1008
        %v1121 = vpack.c.b16 %v1025, %v1017
        %v1122 = vpack.c.b16 %v1026, %v1018
        %v1123 = vpack.c.b16 %v1027, %v1019
        %v1124 = vpack.c.b16 %v1028, %v1020
        %v1125 = vpack.c.b16 %v1029, %v1021
        %v1126 = vpack.c.b16 %v1030, %v1022
        %v1127 = vpack.c.b16 %v1031, %v1023
        %v1128 = vpack.c.b16 %v1032, %v1024
        %v1129 = vpack.c.b16 %v1041, %v1033
        %v1130 = vpack.c.b16 %v1042, %v1034
        %v1131 = vpack.c.b16 %v1043, %v1035
        %v1132 = vpack.c.b16 %v1044, %v1036
        %v1133 = vpack.c.b16 %v1045, %v1037
        %v1134 = vpack.c.b16 %v1046, %v1038
        %v1135 = vpack.c.b16 %v1047, %v1039
        %v1136 = vpack.c.b16 %v1048, %v1040
        %v1137 = vpack.c.b16 %v1057, %v1049
        %v1138 = vpack.c.b16 %v1058, %v1050
        %v1139 = vpack.c.b16 %v1059, %v1051
        %v1140 = vpack.c.b16 %v1060, %v1052
        %v1141 = vpack.c.b16 %v1061, %v1053
        %v1142 = vpack.c.b16 %v1062, %v1054
        %v1143 = vpack.c.b16 %v1063, %v1055
        %v1144 = vpack.c.b16 %v1064, %v1056
        %v1145 = vpack.c.b16 %v1073, %v1065
        %v1146 = vpack.c.b16 %v1074, %v1066
        %v1147 = vpack.c.b16 %v1075, %v1067
        %v1148 = vpack.c.b16 %v1076, %v1068
        %v1149 = vpack.c.b16 %v1077, %v1069
        %v1150 = vpack.c.b16 %v1078, %v1070
        %v1151 = vpack.c.b16 %v1079, %v1071
        %v1152 = vpack.c.b16 %v1080, %v1072
        %v1153 = vpack.c.b16 %v1089, %v1081
        %v1154 = vpack.c.b16 %v1090, %v1082
        %v1155 = vpack.c.b16 %v1091, %v1083
        %v1156 = vpack.c.b16 %v1092, %v1084
        %v1157 = vpack.c.b16 %v1093, %v1085
        %v1158 = vpack.c.b16 %v1094, %v1086
        %v1159 = vpack.c.b16 %v1095, %v1087
        %v1160 = vpack.c.b16 %v1096, %v1088
        %1225 = vmatpush.bf16.msra.mxu0 %v1153
        %1226 = vmatpush.bf16.msra.mxu0 %v1145
        %1227 = vmatpush.bf16.msra.mxu0 %v1137
        %1228 = vmatpush.bf16.msra.mxu0 %v1129
        %1229 = vmatpush.bf16.msra.mxu0 %v1121
        %1230 = vmatpush.bf16.msra.mxu0 %v1113
        %1231 = vmatpush.bf16.msra.mxu0 %v1105
        %1232 = vmatpush.bf16.msra.mxu0 %v1097
        %1233 = vmatmul.bf16.gmra.mxu0 %v883
        %v1234 = vpop.f32.mrf.mxu0
        %v1235 = vadd.f32 %v889, %v1234
        %v1236 = vpop.f32.mrf.mxu0
        %v1237 = vadd.f32 %v889, %v1236
        %1238 = vmatmul.bf16.gmra.mxu0 %v884
        %v1239 = vpop.f32.mrf.mxu0
        %v1240 = vadd.f32 %v889, %v1239
        %v1241 = vpop.f32.mrf.mxu0
        %v1242 = vadd.f32 %v889, %v1241
        %1243 = vmatmul.bf16.gmra.mxu0 %v885
        %v1244 = vpop.f32.mrf.mxu0
        %v1245 = vadd.f32 %v889, %v1244
        %v1246 = vpop.f32.mrf.mxu0
        %v1247 = vadd.f32 %v889, %v1246
        %1248 = vmatmul.bf16.gmra.mxu0 %v886
        %v1249 = vpop.f32.mrf.mxu0
        %v1250 = vadd.f32 %v889, %v1249
        %v1251 = vpop.f32.mrf.mxu0
        %v1252 = vadd.f32 %v889, %v1251
        %1253 = vdwg.mxu0
        %1254 = vmatpush.bf16.msra.mxu0 %v1154
        %1255 = vmatpush.bf16.msra.mxu0 %v1146
        %1256 = vmatpush.bf16.msra.mxu0 %v1138
        %1257 = vmatpush.bf16.msra.mxu0 %v1130
        %1258 = vmatpush.bf16.msra.mxu0 %v1122
        %1259 = vmatpush.bf16.msra.mxu0 %v1114
        %1260 = vmatpush.bf16.msra.mxu0 %v1106
        %1261 = vmatpush.bf16.msra.mxu0 %v1098
        %1262 = vmatmul.bf16.gmra.mxu0 %v883
        %v1263 = vpop.f32.mrf.mxu0
        %v1264 = vadd.f32 %v890, %v1263
        %v1265 = vpop.f32.mrf.mxu0
        %v1266 = vadd.f32 %v890, %v1265
        %1267 = vmatmul.bf16.gmra.mxu0 %v884
        %v1268 = vpop.f32.mrf.mxu0
        %v1269 = vadd.f32 %v890, %v1268
        %v1270 = vpop.f32.mrf.mxu0
        %v1271 = vadd.f32 %v890, %v1270
        %1272 = vmatmul.bf16.gmra.mxu0 %v885
        %v1273 = vpop.f32.mrf.mxu0
        %v1274 = vadd.f32 %v890, %v1273
        %v1275 = vpop.f32.mrf.mxu0
        %v1276 = vadd.f32 %v890, %v1275
        %1277 = vmatmul.bf16.gmra.mxu0 %v886
        %v1278 = vpop.f32.mrf.mxu0
        %v1279 = vadd.f32 %v890, %v1278
        %v1280 = vpop.f32.mrf.mxu0
        %v1281 = vadd.f32 %v890, %v1280
        %1282 = vdwg.mxu0
        %1283 = vmatpush.bf16.msra.mxu0 %v1155
        %1284 = vmatpush.bf16.msra.mxu0 %v1147
        %1285 = vmatpush.bf16.msra.mxu0 %v1139
        %1286 = vmatpush.bf16.msra.mxu0 %v1131
        %1287 = vmatpush.bf16.msra.mxu0 %v1123
        %1288 = vmatpush.bf16.msra.mxu0 %v1115
        %1289 = vmatpush.bf16.msra.mxu0 %v1107
        %1290 = vmatpush.bf16.msra.mxu0 %v1099
        %1291 = vmatmul.bf16.gmra.mxu0 %v883
        %v1292 = vpop.f32.mrf.mxu0
        %v1293 = vadd.f32 %v891, %v1292
        %v1294 = vpop.f32.mrf.mxu0
        %v1295 = vadd.f32 %v891, %v1294
        %1296 = vmatmul.bf16.gmra.mxu0 %v884
        %v1297 = vpop.f32.mrf.mxu0
        %v1298 = vadd.f32 %v891, %v1297
        %v1299 = vpop.f32.mrf.mxu0
        %v1300 = vadd.f32 %v891, %v1299
        %1301 = vmatmul.bf16.gmra.mxu0 %v885
        %v1302 = vpop.f32.mrf.mxu0
        %v1303 = vadd.f32 %v891, %v1302
        %v1304 = vpop.f32.mrf.mxu0
        %v1305 = vadd.f32 %v891, %v1304
        %1306 = vmatmul.bf16.gmra.mxu0 %v886
        %v1307 = vpop.f32.mrf.mxu0
        %v1308 = vadd.f32 %v891, %v1307
        %v1309 = vpop.f32.mrf.mxu0
        %v1310 = vadd.f32 %v891, %v1309
        %1311 = vdwg.mxu0
        %1312 = vmatpush.bf16.msra.mxu0 %v1156
        %1313 = vmatpush.bf16.msra.mxu0 %v1148
        %1314 = vmatpush.bf16.msra.mxu0 %v1140
        %1315 = vmatpush.bf16.msra.mxu0 %v1132
        %1316 = vmatpush.bf16.msra.mxu0 %v1124
        %1317 = vmatpush.bf16.msra.mxu0 %v1116
        %1318 = vmatpush.bf16.msra.mxu0 %v1108
        %1319 = vmatpush.bf16.msra.mxu0 %v1100
        %1320 = vmatmul.bf16.gmra.mxu0 %v883
        %v1321 = vpop.f32.mrf.mxu0
        %v1322 = vadd.f32 %v892, %v1321
        %v1323 = vpop.f32.mrf.mxu0
        %v1324 = vadd.f32 %v892, %v1323
        %1325 = vmatmul.bf16.gmra.mxu0 %v884
        %v1326 = vpop.f32.mrf.mxu0
        %v1327 = vadd.f32 %v892, %v1326
        %v1328 = vpop.f32.mrf.mxu0
        %v1329 = vadd.f32 %v892, %v1328
        %1330 = vmatmul.bf16.gmra.mxu0 %v885
        %v1331 = vpop.f32.mrf.mxu0
        %v1332 = vadd.f32 %v892, %v1331
        %v1333 = vpop.f32.mrf.mxu0
        %v1334 = vadd.f32 %v892, %v1333
        %1335 = vmatmul.bf16.gmra.mxu0 %v886
        %v1336 = vpop.f32.mrf.mxu0
        %v1337 = vadd.f32 %v892, %v1336
        %v1338 = vpop.f32.mrf.mxu0
        %v1339 = vadd.f32 %v892, %v1338
        %1340 = vdwg.mxu0
        %1341 = vmatpush.bf16.msra.mxu0 %v1157
        %1342 = vmatpush.bf16.msra.mxu0 %v1149
        %1343 = vmatpush.bf16.msra.mxu0 %v1141
        %1344 = vmatpush.bf16.msra.mxu0 %v1133
        %1345 = vmatpush.bf16.msra.mxu0 %v1125
        %1346 = vmatpush.bf16.msra.mxu0 %v1117
        %1347 = vmatpush.bf16.msra.mxu0 %v1109
        %1348 = vmatpush.bf16.msra.mxu0 %v1101
        %1349 = vmatmul.bf16.gmra.mxu0 %v883
        %v1350 = vpop.f32.mrf.mxu0
        %v1351 = vadd.f32 %v893, %v1350
        %v1352 = vpop.f32.mrf.mxu0
        %v1353 = vadd.f32 %v893, %v1352
        %1354 = vmatmul.bf16.gmra.mxu0 %v884
        %v1355 = vpop.f32.mrf.mxu0
        %v1356 = vadd.f32 %v893, %v1355
        %v1357 = vpop.f32.mrf.mxu0
        %v1358 = vadd.f32 %v893, %v1357
        %1359 = vmatmul.bf16.gmra.mxu0 %v885
        %v1360 = vpop.f32.mrf.mxu0
        %v1361 = vadd.f32 %v893, %v1360
        %v1362 = vpop.f32.mrf.mxu0
        %v1363 = vadd.f32 %v893, %v1362
        %1364 = vmatmul.bf16.gmra.mxu0 %v886
        %v1365 = vpop.f32.mrf.mxu0
        %v1366 = vadd.f32 %v893, %v1365
        %v1367 = vpop.f32.mrf.mxu0
        %v1368 = vadd.f32 %v893, %v1367
        %1369 = vdwg.mxu0
        %1370 = vmatpush.bf16.msra.mxu0 %v1158
        %1371 = vmatpush.bf16.msra.mxu0 %v1150
        %1372 = vmatpush.bf16.msra.mxu0 %v1142
        %1373 = vmatpush.bf16.msra.mxu0 %v1134
        %1374 = vmatpush.bf16.msra.mxu0 %v1126
        %1375 = vmatpush.bf16.msra.mxu0 %v1118
        %1376 = vmatpush.bf16.msra.mxu0 %v1110
        %1377 = vmatpush.bf16.msra.mxu0 %v1102
        %1378 = vmatmul.bf16.gmra.mxu0 %v883
        %v1379 = vpop.f32.mrf.mxu0
        %v1380 = vadd.f32 %v894, %v1379
        %v1381 = vpop.f32.mrf.mxu0
        %v1382 = vadd.f32 %v894, %v1381
        %1383 = vmatmul.bf16.gmra.mxu0 %v884
        %v1384 = vpop.f32.mrf.mxu0
        %v1385 = vadd.f32 %v894, %v1384
        %v1386 = vpop.f32.mrf.mxu0
        %v1387 = vadd.f32 %v894, %v1386
        %1388 = vmatmul.bf16.gmra.mxu0 %v885
        %v1389 = vpop.f32.mrf.mxu0
        %v1390 = vadd.f32 %v894, %v1389
        %v1391 = vpop.f32.mrf.mxu0
        %v1392 = vadd.f32 %v894, %v1391
        %1393 = vmatmul.bf16.gmra.mxu0 %v886
        %v1394 = vpop.f32.mrf.mxu0
        %v1395 = vadd.f32 %v894, %v1394
        %v1396 = vpop.f32.mrf.mxu0
        %v1397 = vadd.f32 %v894, %v1396
        %1398 = vdwg.mxu0
        %1399 = vmatpush.bf16.msra.mxu0 %v1159
        %1400 = vmatpush.bf16.msra.mxu0 %v1151
        %1401 = vmatpush.bf16.msra.mxu0 %v1143
        %1402 = vmatpush.bf16.msra.mxu0 %v1135
        %1403 = vmatpush.bf16.msra.mxu0 %v1127
        %1404 = vmatpush.bf16.msra.mxu0 %v1119
        %1405 = vmatpush.bf16.msra.mxu0 %v1111
        %1406 = vmatpush.bf16.msra.mxu0 %v1103
        %1407 = vmatmul.bf16.gmra.mxu0 %v883
        %v1408 = vpop.f32.mrf.mxu0
        %v1409 = vadd.f32 %v895, %v1408
        %v1410 = vpop.f32.mrf.mxu0
        %v1411 = vadd.f32 %v895, %v1410
        %1412 = vmatmul.bf16.gmra.mxu0 %v884
        %v1413 = vpop.f32.mrf.mxu0
        %v1414 = vadd.f32 %v895, %v1413
        %v1415 = vpop.f32.mrf.mxu0
        %v1416 = vadd.f32 %v895, %v1415
        %1417 = vmatmul.bf16.gmra.mxu0 %v885
        %v1418 = vpop.f32.mrf.mxu0
        %v1419 = vadd.f32 %v895, %v1418
        %v1420 = vpop.f32.mrf.mxu0
        %v1421 = vadd.f32 %v895, %v1420
        %1422 = vmatmul.bf16.gmra.mxu0 %v886
        %v1423 = vpop.f32.mrf.mxu0
        %v1424 = vadd.f32 %v895, %v1423
        %v1425 = vpop.f32.mrf.mxu0
        %v1426 = vadd.f32 %v895, %v1425
        %1427 = vdwg.mxu0
        %1428 = vmatpush.bf16.msra.mxu0 %v1160
        %1429 = vmatpush.bf16.msra.mxu0 %v1152
        %1430 = vmatpush.bf16.msra.mxu0 %v1144
        %1431 = vmatpush.bf16.msra.mxu0 %v1136
        %1432 = vmatpush.bf16.msra.mxu0 %v1128
        %1433 = vmatpush.bf16.msra.mxu0 %v1120
        %1434 = vmatpush.bf16.msra.mxu0 %v1112
        %1435 = vmatpush.bf16.msra.mxu0 %v1104
        %1436 = vmatmul.bf16.gmra.mxu0 %v883
        %v1437 = vpop.f32.mrf.mxu0
        %v1438 = vadd.f32 %v896, %v1437
        %v1439 = vpop.f32.mrf.mxu0
        %v1440 = vadd.f32 %v896, %v1439
        %1441 = vmatmul.bf16.gmra.mxu0 %v884
        %v1442 = vpop.f32.mrf.mxu0
        %v1443 = vadd.f32 %v896, %v1442
        %v1444 = vpop.f32.mrf.mxu0
        %v1445 = vadd.f32 %v896, %v1444
        %1446 = vmatmul.bf16.gmra.mxu0 %v885
        %v1447 = vpop.f32.mrf.mxu0
        %v1448 = vadd.f32 %v896, %v1447
        %v1449 = vpop.f32.mrf.mxu0
        %v1450 = vadd.f32 %v896, %v1449
        %1451 = vmatmul.bf16.gmra.mxu0 %v886
        %v1452 = vpop.f32.mrf.mxu0
        %v1453 = vadd.f32 %v896, %v1452
        %v1454 = vpop.f32.mrf.mxu0
        %v1455 = vadd.f32 %v896, %v1454
        %1456 = vdwg.mxu0
        %v1457 = vmax.f32 %v1235, 0.0
        %v1458 = vmax.f32 %v1264, 0.0
        %v1459 = vmax.f32 %v1293, 0.0
        %v1460 = vmax.f32 %v1322, 0.0
        %v1461 = vmax.f32 %v1351, 0.0
        %v1462 = vmax.f32 %v1380, 0.0
        %v1463 = vmax.f32 %v1409, 0.0
        %v1464 = vmax.f32 %v1438, 0.0
        %v1465 = vmax.f32 %v1237, 0.0
        %v1466 = vmax.f32 %v1266, 0.0
        %v1467 = vmax.f32 %v1295, 0.0
        %v1468 = vmax.f32 %v1324, 0.0
        %v1469 = vmax.f32 %v1353, 0.0
        %v1470 = vmax.f32 %v1382, 0.0
        %v1471 = vmax.f32 %v1411, 0.0
        %v1472 = vmax.f32 %v1440, 0.0
        %v1473 = vmax.f32 %v1240, 0.0
        %v1474 = vmax.f32 %v1269, 0.0
        %v1475 = vmax.f32 %v1298, 0.0
        %v1476 = vmax.f32 %v1327, 0.0
        %v1477 = vmax.f32 %v1356, 0.0
        %v1478 = vmax.f32 %v1385, 0.0
        %v1479 = vmax.f32 %v1414, 0.0
        %v1480 = vmax.f32 %v1443, 0.0
        %v1481 = vmax.f32 %v1242, 0.0
        %v1482 = vmax.f32 %v1271, 0.0
        %v1483 = vmax.f32 %v1300, 0.0
        %v1484 = vmax.f32 %v1329, 0.0
        %v1485 = vmax.f32 %v1358, 0.0
        %v1486 = vmax.f32 %v1387, 0.0
        %v1487 = vmax.f32 %v1416, 0.0
        %v1488 = vmax.f32 %v1445, 0.0
        %v1489 = vmax.f32 %v1245, 0.0
        %v1490 = vmax.f32 %v1274, 0.0
        %v1491 = vmax.f32 %v1303, 0.0
        %v1492 = vmax.f32 %v1332, 0.0
        %v1493 = vmax.f32 %v1361, 0.0
        %v1494 = vmax.f32 %v1390, 0.0
        %v1495 = vmax.f32 %v1419, 0.0
        %v1496 = vmax.f32 %v1448, 0.0
        %v1497 = vmax.f32 %v1247, 0.0
        %v1498 = vmax.f32 %v1276, 0.0
        %v1499 = vmax.f32 %v1305, 0.0
        %v1500 = vmax.f32 %v1334, 0.0
        %v1501 = vmax.f32 %v1363, 0.0
        %v1502 = vmax.f32 %v1392, 0.0
        %v1503 = vmax.f32 %v1421, 0.0
        %v1504 = vmax.f32 %v1450, 0.0
        %v1505 = vmax.f32 %v1250, 0.0
        %v1506 = vmax.f32 %v1279, 0.0
        %v1507 = vmax.f32 %v1308, 0.0
        %v1508 = vmax.f32 %v1337, 0.0
        %v1509 = vmax.f32 %v1366, 0.0
        %v1510 = vmax.f32 %v1395, 0.0
        %v1511 = vmax.f32 %v1424, 0.0
        %v1512 = vmax.f32 %v1453, 0.0
        %v1513 = vmax.f32 %v1252, 0.0
        %v1514 = vmax.f32 %v1281, 0.0
        %v1515 = vmax.f32 %v1310, 0.0
        %v1516 = vmax.f32 %v1339, 0.0
        %v1517 = vmax.f32 %v1368, 0.0
        %v1518 = vmax.f32 %v1397, 0.0
        %v1519 = vmax.f32 %v1426, 0.0
        %v1520 = vmax.f32 %v1455, 0.0
        %s1521 = smul.u32 %s30, 64
        %v1522 = vlaneseq
        %v1523 = vshrl.u32 %v1522, 7
        %v1524 = vadd.s32 %v1523, 8
        %v1525 = vadd.s32 %v1523, 16
        %v1526 = vadd.s32 %v1523, 24
        %v1527 = vadd.s32 %v1523, 32
        %v1528 = vadd.s32 %v1523, 40
        %v1529 = vadd.s32 %v1523, 48
        %v1530 = vadd.s32 %v1523, 56
        %v1531 = vstv %s1521
        %v1532 = vadd.s32 %v1531, %v1523
        %v1533 = vadd.s32 %v1531, %v1524
        %v1534 = vadd.s32 %v1531, %v1525
        %v1535 = vadd.s32 %v1531, %v1526
        %v1536 = vadd.s32 %v1531, %v1527
        %v1537 = vadd.s32 %v1531, %v1528
        %v1538 = vadd.s32 %v1531, %v1529
        %v1539 = vadd.s32 %v1531, %v1530
        %vm1540 = vcmp.lt.s32.totalorder %v1532, 200
        %vm1541 = vcmp.lt.s32.totalorder %v1533, 200
        %vm1542 = vcmp.lt.s32.totalorder %v1534, 200
        %vm1543 = vcmp.lt.s32.totalorder %v1535, 200
        %vm1544 = vcmp.lt.s32.totalorder %v1536, 200
        %vm1545 = vcmp.lt.s32.totalorder %v1537, 200
        %vm1546 = vcmp.lt.s32.totalorder %v1538, 200
        %vm1547 = vcmp.lt.s32.totalorder %v1539, 200
        %v1548 = vsel %vm1540, 1, 0
        %v1549 = vsel %vm1541, 1, 0
        %v1550 = vsel %vm1542, 1, 0
        %v1551 = vsel %vm1543, 1, 0
        %v1552 = vsel %vm1544, 1, 0
        %v1553 = vsel %vm1545, 1, 0
        %v1554 = vsel %vm1546, 1, 0
        %v1555 = vsel %vm1547, 1, 0
        %vm1556 = vcmp.eq.s32.totalorder %v1548, 1
        %vm1557 = vcmp.eq.s32.totalorder %v1549, 1
        %vm1558 = vcmp.eq.s32.totalorder %v1550, 1
        %vm1559 = vcmp.eq.s32.totalorder %v1551, 1
        %vm1560 = vcmp.eq.s32.totalorder %v1552, 1
        %vm1561 = vcmp.eq.s32.totalorder %v1553, 1
        %vm1562 = vcmp.eq.s32.totalorder %v1554, 1
        %vm1563 = vcmp.eq.s32.totalorder %v1555, 1
        %v1564 = vsel %vm1556, %v1457, -inf
        %v1565 = vsel %vm1556, %v1458, -inf
        %v1566 = vsel %vm1556, %v1459, -inf
        %v1567 = vsel %vm1556, %v1460, -inf
        %v1568 = vsel %vm1556, %v1461, -inf
        %v1569 = vsel %vm1556, %v1462, -inf
        %v1570 = vsel %vm1556, %v1463, -inf
        %v1571 = vsel %vm1556, %v1464, -inf
        %v1572 = vsel %vm1557, %v1465, -inf
        %v1573 = vsel %vm1557, %v1466, -inf
        %v1574 = vsel %vm1557, %v1467, -inf
        %v1575 = vsel %vm1557, %v1468, -inf
        %v1576 = vsel %vm1557, %v1469, -inf
        %v1577 = vsel %vm1557, %v1470, -inf
        %v1578 = vsel %vm1557, %v1471, -inf
        %v1579 = vsel %vm1557, %v1472, -inf
        %v1580 = vsel %vm1558, %v1473, -inf
        %v1581 = vsel %vm1558, %v1474, -inf
        %v1582 = vsel %vm1558, %v1475, -inf
        %v1583 = vsel %vm1558, %v1476, -inf
        %v1584 = vsel %vm1558, %v1477, -inf
        %v1585 = vsel %vm1558, %v1478, -inf
        %v1586 = vsel %vm1558, %v1479, -inf
        %v1587 = vsel %vm1558, %v1480, -inf
        %v1588 = vsel %vm1559, %v1481, -inf
        %v1589 = vsel %vm1559, %v1482, -inf
        %v1590 = vsel %vm1559, %v1483, -inf
        %v1591 = vsel %vm1559, %v1484, -inf
        %v1592 = vsel %vm1559, %v1485, -inf
        %v1593 = vsel %vm1559, %v1486, -inf
        %v1594 = vsel %vm1559, %v1487, -inf
        %v1595 = vsel %vm1559, %v1488, -inf
        %v1596 = vsel %vm1560, %v1489, -inf
        %v1597 = vsel %vm1560, %v1490, -inf
        %v1598 = vsel %vm1560, %v1491, -inf
        %v1599 = vsel %vm1560, %v1492, -inf
        %v1600 = vsel %vm1560, %v1493, -inf
        %v1601 = vsel %vm1560, %v1494, -inf
        %v1602 = vsel %vm1560, %v1495, -inf
        %v1603 = vsel %vm1560, %v1496, -inf
        %v1604 = vsel %vm1561, %v1497, -inf
        %v1605 = vsel %vm1561, %v1498, -inf
        %v1606 = vsel %vm1561, %v1499, -inf
        %v1607 = vsel %vm1561, %v1500, -inf
        %v1608 = vsel %vm1561, %v1501, -inf
        %v1609 = vsel %vm1561, %v1502, -inf
        %v1610 = vsel %vm1561, %v1503, -inf
        %v1611 = vsel %vm1561, %v1504, -inf
        %v1612 = vsel %vm1562, %v1505, -inf
        %v1613 = vsel %vm1562, %v1506, -inf
        %v1614 = vsel %vm1562, %v1507, -inf
        %v1615 = vsel %vm1562, %v1508, -inf
        %v1616 = vsel %vm1562, %v1509, -inf
        %v1617 = vsel %vm1562, %v1510, -inf
        %v1618 = vsel %vm1562, %v1511, -inf
        %v1619 = vsel %vm1562, %v1512, -inf
        %v1620 = vsel %vm1563, %v1513, -inf
        %v1621 = vsel %vm1563, %v1514, -inf
        %v1622 = vsel %vm1563, %v1515, -inf
        %v1623 = vsel %vm1563, %v1516, -inf
        %v1624 = vsel %vm1563, %v1517, -inf
        %v1625 = vsel %vm1563, %v1518, -inf
        %v1626 = vsel %vm1563, %v1519, -inf
        %v1627 = vsel %vm1563, %v1520, -inf
        %v1628 = vmax.f32 %v1564, %v1572
        %v1629 = vmax.f32 %v1628, %v1580
        %v1630 = vmax.f32 %v1629, %v1588
        %v1631 = vmax.f32 %v1630, %v1596
        %v1632 = vmax.f32 %v1631, %v1604
        %v1633 = vmax.f32 %v1632, %v1612
        %v1634 = vmax.f32 %v1633, %v1620
        %v1635 = vrot.slane %v1634, 4
        %v1636 = vmax.f32 %v1634, %v1635
        %v1637 = vrot.slane %v1636, 2
        %v1638 = vmax.f32 %v1636, %v1637
        %v1639 = vrot.slane %v1638, 1
        %v1640 = vmax.f32 %v1638, %v1639
        %v1641 = vmax.f32 %v1565, %v1573
        %v1642 = vmax.f32 %v1641, %v1581
        %v1643 = vmax.f32 %v1642, %v1589
        %v1644 = vmax.f32 %v1643, %v1597
        %v1645 = vmax.f32 %v1644, %v1605
        %v1646 = vmax.f32 %v1645, %v1613
        %v1647 = vmax.f32 %v1646, %v1621
        %v1648 = vrot.slane %v1647, 4
        %v1649 = vmax.f32 %v1647, %v1648
        %v1650 = vrot.slane %v1649, 2
        %v1651 = vmax.f32 %v1649, %v1650
        %v1652 = vrot.slane %v1651, 1
        %v1653 = vmax.f32 %v1651, %v1652
        %v1654 = vmax.f32 %v1566, %v1574
        %v1655 = vmax.f32 %v1654, %v1582
        %v1656 = vmax.f32 %v1655, %v1590
        %v1657 = vmax.f32 %v1656, %v1598
        %v1658 = vmax.f32 %v1657, %v1606
        %v1659 = vmax.f32 %v1658, %v1614
        %v1660 = vmax.f32 %v1659, %v1622
        %v1661 = vrot.slane %v1660, 4
        %v1662 = vmax.f32 %v1660, %v1661
        %v1663 = vrot.slane %v1662, 2
        %v1664 = vmax.f32 %v1662, %v1663
        %v1665 = vrot.slane %v1664, 1
        %v1666 = vmax.f32 %v1664, %v1665
        %v1667 = vmax.f32 %v1567, %v1575
        %v1668 = vmax.f32 %v1667, %v1583
        %v1669 = vmax.f32 %v1668, %v1591
        %v1670 = vmax.f32 %v1669, %v1599
        %v1671 = vmax.f32 %v1670, %v1607
        %v1672 = vmax.f32 %v1671, %v1615
        %v1673 = vmax.f32 %v1672, %v1623
        %v1674 = vrot.slane %v1673, 4
        %v1675 = vmax.f32 %v1673, %v1674
        %v1676 = vrot.slane %v1675, 2
        %v1677 = vmax.f32 %v1675, %v1676
        %v1678 = vrot.slane %v1677, 1
        %v1679 = vmax.f32 %v1677, %v1678
        %v1680 = vmax.f32 %v1568, %v1576
        %v1681 = vmax.f32 %v1680, %v1584
        %v1682 = vmax.f32 %v1681, %v1592
        %v1683 = vmax.f32 %v1682, %v1600
        %v1684 = vmax.f32 %v1683, %v1608
        %v1685 = vmax.f32 %v1684, %v1616
        %v1686 = vmax.f32 %v1685, %v1624
        %v1687 = vrot.slane %v1686, 4
        %v1688 = vmax.f32 %v1686, %v1687
        %v1689 = vrot.slane %v1688, 2
        %v1690 = vmax.f32 %v1688, %v1689
        %v1691 = vrot.slane %v1690, 1
        %v1692 = vmax.f32 %v1690, %v1691
        %v1693 = vmax.f32 %v1569, %v1577
        %v1694 = vmax.f32 %v1693, %v1585
        %v1695 = vmax.f32 %v1694, %v1593
        %v1696 = vmax.f32 %v1695, %v1601
        %v1697 = vmax.f32 %v1696, %v1609
        %v1698 = vmax.f32 %v1697, %v1617
        %v1699 = vmax.f32 %v1698, %v1625
        %v1700 = vrot.slane %v1699, 4
        %v1701 = vmax.f32 %v1699, %v1700
        %v1702 = vrot.slane %v1701, 2
        %v1703 = vmax.f32 %v1701, %v1702
        %v1704 = vrot.slane %v1703, 1
        %v1705 = vmax.f32 %v1703, %v1704
        %v1706 = vmax.f32 %v1570, %v1578
        %v1707 = vmax.f32 %v1706, %v1586
        %v1708 = vmax.f32 %v1707, %v1594
        %v1709 = vmax.f32 %v1708, %v1602
        %v1710 = vmax.f32 %v1709, %v1610
        %v1711 = vmax.f32 %v1710, %v1618
        %v1712 = vmax.f32 %v1711, %v1626
        %v1713 = vrot.slane %v1712, 4
        %v1714 = vmax.f32 %v1712, %v1713
        %v1715 = vrot.slane %v1714, 2
        %v1716 = vmax.f32 %v1714, %v1715
        %v1717 = vrot.slane %v1716, 1
        %v1718 = vmax.f32 %v1716, %v1717
        %v1719 = vmax.f32 %v1571, %v1579
        %v1720 = vmax.f32 %v1719, %v1587
        %v1721 = vmax.f32 %v1720, %v1595
        %v1722 = vmax.f32 %v1721, %v1603
        %v1723 = vmax.f32 %v1722, %v1611
        %v1724 = vmax.f32 %v1723, %v1619
        %v1725 = vmax.f32 %v1724, %v1627
        %v1726 = vrot.slane %v1725, 4
        %v1727 = vmax.f32 %v1725, %v1726
        %v1728 = vrot.slane %v1727, 2
        %v1729 = vmax.f32 %v1727, %v1728
        %v1730 = vrot.slane %v1729, 1
        %v1731 = vmax.f32 %v1729, %v1730
        %v1732 = vld [vmem:[#allocation8] sm:$0xff]
        %v1733 = vld [vmem:[#allocation8 + $0x8] sm:$0xff]
        %v1734 = vstv %s29
        %vm1735 = vcmp.eq.s32.totalorder %v1523, %v1734
        %v1744 = vrot.slane %v1653, 6
        %v1745 = vrot.slane %v1666, 4
        %v1746 = vrot.slane %v1679, 2
        %v1747 = vrot.slane %v1705, 6
        %v1748 = vrot.slane %v1718, 4
        %v1749 = vrot.slane %v1731, 2
        %vm1750 = vcmask 1041408
        %v1751 = vsel %vm1750, %v1640, %v1744
        %vm1752 = vcmask 1045508
        %v1753 = vsel %vm1752, %v1745, %v1746
        %vm1754 = vcmask 1043456
        %v1755 = vsel %vm1754, %v1751, %v1753
        %v1756 = vsel %vm1750, %v1692, %v1747
        %v1757 = vsel %vm1752, %v1748, %v1749
        %v1758 = vsel %vm1754, %v1756, %v1757
        %v1761 = vmax.f32 %v1732, %v1755
        %v1762 = vmax.f32 %v1733, %v1758
        %v1763 = vsel %vm1735, 1, 0
        %vm1764 = vcmp.eq.s32.totalorder %v1763, 1
        %1767 = vst [vmem:[#allocation1] ss:$4 sm:$0xff] %v1761
        %s1768 = scalar_lea.vmem [#allocation1], 32
        %1769 = vst [vmem:[%s1768] ss:$4 sm:$0xff] %v1762
        %v1770 = vld.sshfl [vmem:[#allocation1] sm:$0xff pattern:$0x73625140]
        %v1771 = vld.sshfl [vmem:[#allocation1 + $0x8] sm:$0xff pattern:$0x73625140]
        %v1772 = vld.sshfl [vmem:[#allocation1 + $0x10] sm:$0xff pattern:$0x73625140]
        %v1773 = vld.sshfl [vmem:[#allocation1 + $0x18] sm:$0xff pattern:$0x73625140]
        %v1774 = vld.sshfl [vmem:[#allocation1 + $0x20] sm:$0xff pattern:$0x73625140]
        %v1775 = vld.sshfl [vmem:[#allocation1 + $0x28] sm:$0xff pattern:$0x73625140]
        %v1776 = vld.sshfl [vmem:[#allocation1 + $0x30] sm:$0xff pattern:$0x73625140]
        %v1777 = vld.sshfl [vmem:[#allocation1 + $0x38] sm:$0xff pattern:$0x73625140]
        %1788 = vst [vmem:[#allocation1] ss:$4 sm:$0xff] %v1732
        %s1789 = scalar_lea.vmem [#allocation1], 32
        %1790 = vst [vmem:[%s1789] ss:$4 sm:$0xff] %v1733
        %v1791 = vld.sshfl [vmem:[#allocation1] sm:$0xff pattern:$0x73625140]
        %v1792 = vld.sshfl [vmem:[#allocation1 + $0x8] sm:$0xff pattern:$0x73625140]
        %v1793 = vld.sshfl [vmem:[#allocation1 + $0x10] sm:$0xff pattern:$0x73625140]
        %v1794 = vld.sshfl [vmem:[#allocation1 + $0x18] sm:$0xff pattern:$0x73625140]
        %v1795 = vld.sshfl [vmem:[#allocation1 + $0x20] sm:$0xff pattern:$0x73625140]
        %v1796 = vld.sshfl [vmem:[#allocation1 + $0x28] sm:$0xff pattern:$0x73625140]
        %v1797 = vld.sshfl [vmem:[#allocation1 + $0x30] sm:$0xff pattern:$0x73625140]
        %v1798 = vld.sshfl [vmem:[#allocation1 + $0x38] sm:$0xff pattern:$0x73625140]
        %v1807 = vsel %vm1764, %v1770, %v1791
        %v1808 = vsel %vm1764, %v1771, %v1792
        %v1809 = vsel %vm1764, %v1772, %v1793
        %v1810 = vsel %vm1764, %v1773, %v1794
        %v1811 = vsel %vm1764, %v1774, %v1795
        %v1812 = vsel %vm1764, %v1775, %v1796
        %v1813 = vsel %vm1764, %v1776, %v1797
        %v1814 = vsel %vm1764, %v1777, %v1798
        %v1823 = vrot.slane %v1808, 6
        %v1824 = vrot.slane %v1809, 4
        %v1825 = vrot.slane %v1810, 2
        %v1826 = vrot.slane %v1812, 6
        %v1827 = vrot.slane %v1813, 4
        %v1828 = vrot.slane %v1814, 2
        %v1829 = vsel %vm1750, %v1807, %v1823
        %v1830 = vsel %vm1752, %v1824, %v1825
        %v1831 = vsel %vm1754, %v1829, %v1830
        %v1832 = vsel %vm1750, %v1811, %v1826
        %v1833 = vsel %vm1752, %v1827, %v1828
        %v1834 = vsel %vm1754, %v1832, %v1833
        %1837 = vst [vmem:[#allocation8] sm:$0xff] %v1831
        %1838 = vst [vmem:[#allocation8 + $0x8] sm:$0xff] %v1834
        // Predicated region
        $region81: #{tpu_custom_call.1} parent=63 // pred_check
          %p1839 = pneg %p288
        $region82: #{tpu_custom_call.1} parent=63 // pred_check_branch
          %1841 = sbr.rel (%p1839) target = $region84
        $region83: #{tpu_custom_call.1} parent=63 // pred_region
          %1843 = vsyncadd [#allocation4], 0
          %s1845 = sshll.u32 [#allocation8], 4
          %s1846 = int_to_ptr.vmem [resolvable:$true] %s1845
          %s1847 = sshll.u32 %s11, 4
          %s1848 = int_to_ptr.hbm [resolvable:$true] %s1847
          %1850 = dma.vmem_to_hbm [thread:$0]  %s1846, 256, %s1848, [#allocation4]
        $region84: #{tpu_custom_call.1} parent=63 // pred_fallthru
          _
        // Predicated region
        $region85: #{tpu_custom_call.1} parent=63 // pred_check
          %p1851 = pneg %p288
        $region86: #{tpu_custom_call.1} parent=63 // pred_check_branch
          %1853 = sbr.rel (%p1851) target = $region88
        $region87: #{tpu_custom_call.1} parent=63 // pred_region
          %1855 = dma.done [#allocation4], 256
        $region88: #{tpu_custom_call.1} parent=63 // pred_fallthru
          _
      $region64: #{tpu_custom_call.1} parent=5 // pred_fallthru
        _
      %p1856 = scmp.le.s32.totalorder 2, %s20
      // Predicated region
      $region89: #{tpu_custom_call.1} parent=5 // pred_check
        %p1857 = pneg %p1856
      $region90: #{tpu_custom_call.1} parent=5 // pred_check_branch
        %1859 = sbr.rel (%p1857) target = $region92
      $region91: #{tpu_custom_call.1} parent=5 // pred_region
        %s1860 = ssub.s32 %s20, 2
      $region92: #{tpu_custom_call.1} parent=5 // pred_fallthru
        _
    $region6: #{tpu_custom_call.1} parent=1 // loop_footer
      %s24 = sadd.s32 1, %s20
    $region7: #{tpu_custom_call.1} parent=1 // loop_footer_branch
      %19 = sbr.rel target = $region3
    $region8: #{tpu_custom_call.1} parent=1 // loop_exit
      _
    %1861 = vsyncpa [#allocation3], 1
    %s1862 = scalar_lea.sflag [#allocation3], 1
    %1863 = vsyncpa %s1862, 1
    %1864 = vsyncpa [#allocation6], 1
    %1865 = vsyncpa [#allocation4], 1
    %s1866 = scalar_lea.sflag [#allocation4], 1
    %1867 = vsyncpa %s1866, 1

</llo_original>
